<compile_context>
chip_gen: v5e
topology: v5e:2x2
jax: 0.10.0
libtpu: 0.0.40
codegen_flags: <defaults>
</compile_context>

<pallas_src>
import functools

import jax
import jax.numpy as jnp
import numpy as np
from jax import lax
from jax.experimental import pallas as pl
from jax.experimental.pallas import tpu as pltpu


# Tap order: t = (dy + 1) * 3 + (dx + 1)  <->  HWIO weight[ky = dy + 1, kx = dx + 1].
_OFFSETS = tuple((dy, dx) for dy in (-1, 0, 1) for dx in (-1, 0, 1))


# ----------------------------------------------------------------------------
# Host-side helpers (trace-time constants / weight packing)
# ----------------------------------------------------------------------------
def _interp_matrix(out_size: int, in_size: int) -> np.ndarray:
    """nn.Upsample(mode='bilinear', align_corners=True) interpolation matrix."""
    if out_size > 1:
        src = np.arange(out_size, dtype=np.float64) * (in_size - 1) / (out_size - 1)
    else:
        src = np.zeros((out_size,), np.float64)
    i0 = np.clip(np.floor(src).astype(np.int64), 0, in_size - 1)
    i1 = np.minimum(i0 + 1, in_size - 1)
    w1 = (src - i0).astype(np.float32)
    w0 = 1.0 - w1
    eye = np.eye(in_size, dtype=np.float32)
    return w0[:, None] * eye[i0] + w1[:, None] * eye[i1]          # (out_size, in_size)


def _tap_masks(H: int, W: int, nb: int) -> np.ndarray:
    """(9, 1, nb*H*W) {0,1} f32 boundary masks (hoisted out of the kernel)."""
    HW = H * W
    pos = np.arange(nb * HW) % HW            # per-image flattened position
    row, col = pos // W, pos % W
    masks = [(((row + dy) >= 0) & ((row + dy) < H) &
              ((col + dx) >= 0) & ((col + dx) < W)).astype(np.float32)
             for dy, dx in _OFFSETS]
    return np.stack(masks)[:, None, :]


def _pack_weight(w_hwio, cout_pad, cin_pad=None):
    """(3, 3, Cin, Cout) HWIO -> (9*cout_pad, cin_pad), tap-major rows (matches _OFFSETS).

    NOTE: real PyTorch Conv2d weights are OIHW; transpose (2, 3, 1, 0) to HWIO first.
    """
    kh, kw, cin, cout = w_hwio.shape
    if cin_pad is None:
        cin_pad = cin
    w = jnp.transpose(w_hwio, (0, 1, 3, 2)).reshape(kh * kw, cout, cin)   # (9, Cout, Cin)
    w = jnp.pad(w, ((0, 0), (0, cout_pad - cout), (0, cin_pad - cin)))
    return w.reshape(kh * kw * cout_pad, cin_pad)


# ----------------------------------------------------------------------------
# Fused kernel: one grid step = `nb` images stacked along the lane (H*W) axis.
# ----------------------------------------------------------------------------
def _decoder_block_kernel(H, W, nb, cp, m_ref, mask_ref, x_ref, skip_ref,
                          w1_ref, w2_ref, b1_ref, b2_ref, o_ref):
    # m_ref:    (HiWi, HW)        bilinear interp matrix (resident)
    # mask_ref: (9, 1, nb*HW)     precomputed boundary masks (resident)
    # x_ref:    (1, nb, Cin, HiWi)
    # skip_ref: (1, nb, Cs,  HW)
    # w1_ref:   (9*cp, Cin+Cs)    merged conv1 weights, tap-major rows, Cout padded to cp
    # w2_ref:   (9*cp, cp)        conv2 weights (Cin zero-padded to cp)
    # b1_ref / b2_ref: (cp, 1)    biases (zero-padded)
    # o_ref:    (1, nb, Cout, HW)
    Cout = o_ref.shape[2]
    HW = H * W
    L = nb * HW
    m = m_ref[...]

    # --- bilinear upsample (align_corners=True): one small matmul per image ------------
    # results stacked along lanes (concat offsets are multiples of 128 -> no relayout).
    ups = [jnp.dot(x_ref[0, n], m, preferred_element_type=jnp.float32) for n in range(nb)]
    skips = [skip_ref[0, n].astype(jnp.float32) for n in range(nb)]
    up = ups[0] if nb == 1 else jnp.concatenate(ups, axis=1)             # (Cin, L)
    skip = skips[0] if nb == 1 else jnp.concatenate(skips, axis=1)       # (Cs,  L)

    # torch.cat([up, skip], dim=1) -> single (Cin+Cs, L) activation (merged weights).
    cat = jnp.concatenate([up, skip], axis=0)

    def conv3x3_relu(src, w_ref, b_ref):
        # ONE matmul for all 9 taps (weights stacked along M); the taps become lane
        # rolls of tile-aligned (cp, L) slices of z, masked with precomputed masks.
        z = jnp.dot(w_ref[...], src, preferred_element_type=jnp.float32)  # (9*cp, L)
        acc = jnp.broadcast_to(b_ref[...], (cp, L))                       # bias folded in
        for t, (dy, dx) in enumerate(_OFFSETS):
            zt = z[t * cp:(t + 1) * cp]                                   # tile-aligned
            if dy == 0 and dx == 0:
                acc = acc + zt                                            # center: always valid
            else:
                shift = (-(dy * W + dx)) % L
                acc = acc + pltpu.roll(zt, shift, axis=1) * mask_ref[t]
        return jnp.maximum(acc, 0.0)                                      # (cp, L)

    h1 = conv3x3_relu(cat, w1_ref, b1_ref)        # padded rows stay exactly zero
    out = conv3x3_relu(h1, w2_ref, b2_ref)

    for n in range(nb):                            # lane-aligned per-image stores
        o_ref[0, n] = out[:Cout, n * HW:(n + 1) * HW].astype(o_ref.dtype)


# ----------------------------------------------------------------------------
# Wrapper: NCHW in / NCHW out, single fused pallas_call.
# ----------------------------------------------------------------------------
@functools.partial(jax.jit, static_argnames=("up_sample_size",))
def decoder_block_forward(x_nchw, skip_nchw, w1, b1, w2, b2, *, up_sample_size):
    N, Cin, Hi, Wi = x_nchw.shape
    _, Cs, Ho, Wo = skip_nchw.shape
    Cout = w1.shape[-1]
    assert Ho == up_sample_size and Wo == up_sample_size
    HW, HiWi = Ho * Wo, Hi * Wi

    # Images per grid step: batch along lanes for wide lane-dense work, but keep the
    # grid extent >= 2 so the "parallel" axis feeds both v7x TensorCores.
    nb = N // 2 if (N >= 2 and N % 2 == 0) else 1
    G = N // nb
    L = nb * HW
    cp = -(-Cout // 8) * 8                         # Cout rounded up to a sublane tile

    # Trace-time numpy constants.
    m = np.kron(_interp_matrix(Ho, Hi), _interp_matrix(Wo, Wi)).T.astype(np.float32)
    masks = _tap_masks(Ho, Wo, nb)

    # Merged conv1 weight (concat order: [upsampled x, skip]); conv2 Cin padded to cp.
    w1p = _pack_weight(w1, cp)                     # (9*cp, Cin+Cs)
    w2p = _pack_weight(w2, cp, cin_pad=cp)         # (9*cp, cp)
    b1p = jnp.pad(b1, (0, cp - Cout)).reshape(cp, 1)
    b2p = jnp.pad(b2, (0, cp - Cout)).reshape(cp, 1)

    x_r = x_nchw.reshape(G, nb, Cin, HiWi)         # pure reshapes, no transposes
    skip_r = skip_nchw.reshape(G, nb, Cs, HW)

    kernel = functools.partial(_decoder_block_kernel, Ho, Wo, nb, cp)
    out_r = pl.pallas_call(
        kernel,
        out_shape=jax.ShapeDtypeStruct((G, nb, Cout, HW), x_nchw.dtype),
        grid=(G,),
        in_specs=[
            pl.BlockSpec((HiWi, HW), lambda g: (0, 0)),
            pl.BlockSpec((9, 1, L), lambda g: (0, 0, 0)),
            pl.BlockSpec((1, nb, Cin, HiWi), lambda g: (g, 0, 0, 0)),
            pl.BlockSpec((1, nb, Cs, HW), lambda g: (g, 0, 0, 0)),
            pl.BlockSpec((9 * cp, Cin + Cs), lambda g: (0, 0)),
            pl.BlockSpec((9 * cp, cp), lambda g: (0, 0)),
            pl.BlockSpec((cp, 1), lambda g: (0, 0)),
            pl.BlockSpec((cp, 1), lambda g: (0, 0)),
        ],
        out_specs=pl.BlockSpec((1, nb, Cout, HW), lambda g: (g, 0, 0, 0)),
        compiler_params=pltpu.CompilerParams(dimension_semantics=("parallel",)),
    )(jnp.asarray(m), jnp.asarray(masks), x_r, skip_r, w1p, w2p, b1p, b2p)

    return out_r.reshape(N, Cout, Ho, Wo)


class DecoderBlockPallas:
    def __init__(self, in_channels, out_channels, up_sample_size, key):
        k1, k2, k3, k4 = jax.random.split(key, 4)
        c1_in = in_channels + out_channels
        bound1 = 1.0 / np.sqrt(c1_in * 9)
        bound2 = 1.0 / np.sqrt(out_channels * 9)
        # Deterministic synthetic init (PyTorch Conv2d init bounds), HWIO layout.
        self.w1 = jax.random.uniform(k1, (3, 3, c1_in, out_channels), jnp.float32,
                                     -bound1, bound1)
        self.b1 = jax.random.uniform(k2, (out_channels,), jnp.float32, -bound1, bound1)
        self.w2 = jax.random.uniform(k3, (3, 3, out_channels, out_channels), jnp.float32,
                                     -bound2, bound2)
        self.b2 = jax.random.uniform(k4, (out_channels,), jnp.float32, -bound2, bound2)
        self.up_sample_size = up_sample_size

    def __call__(self, x_nchw, skip_nchw):
        return decoder_block_forward(x_nchw, skip_nchw, self.w1, self.b1,
                                     self.w2, self.b2,
                                     up_sample_size=self.up_sample_size)


def _reference_forward(block, x_nchw, skip_nchw):
    """Pure-JAX reference (XLA conv / einsum) for the correctness check."""
    x = jnp.transpose(x_nchw, (0, 2, 3, 1))
    skip = jnp.transpose(skip_nchw, (0, 2, 3, 1))
    _, Hi, Wi, _ = x.shape
    ah = jnp.asarray(_interp_matrix(block.up_sample_size, Hi))
    aw = jnp.asarray(_interp_matrix(block.up_sample_size, Wi))
    up = jnp.einsum('hp,wq,npqc->nhwc', ah, aw, x)
    cat = jnp.concatenate([up, skip], axis=-1)
    dn = lax.conv_dimension_numbers(cat.shape, block.w1.shape, ('NHWC', 'HWIO', 'NHWC'))
    y = lax.conv_general_dilated(cat, block.w1, (1, 1), 'SAME', dimension_numbers=dn)
    y = jnp.maximum(y + block.b1, 0.0)
    y = lax.conv_general_dilated(y, block.w2, (1, 1), 'SAME', dimension_numbers=dn)
    y = jnp.maximum(y + block.b2, 0.0)
    return jnp.transpose(y, (0, 3, 1, 2))


if __name__ == "__main__":
    key = jax.random.PRNGKey(0)
    k_x, k_skip, k_params = jax.random.split(key, 3)

    N = 4                      # even -> 2 images per grid step, grid extent 2
    in_channels = 8
    out_channels = 4
    H_in = W_in = 8
    up_sample_size = 16

    x = jax.random.normal(k_x, (N, in_channels, H_in, W_in), jnp.float32)
    skip = jax.random.normal(k_skip, (N, out_channels, up_sample_size, up_sample_size),
                             jnp.float32)

    block = DecoderBlockPallas(in_channels, out_channels, up_sample_size, k_params)

    out = jax.block_until_ready(block(x, skip))
    assert out.shape == (N, out_channels, up_sample_size, up_sample_size), out.shape

    ref = jax.block_until_ready(_reference_forward(block, x, skip))
    # Tightened vs. previous 1e-2; kept at 1e-4 to absorb MXU f32-emulation rounding
    # (present in both the Pallas path and the XLA reference conv).
    err = float(np.max(np.abs(np.asarray(out) - np.asarray(ref))))
    assert np.allclose(np.asarray(out), np.asarray(ref), atol=1e-4, rtol=1e-4), err

    print("KERNEL_OK")
</pallas_src>

<mosaic_0001>
module attributes {stable_mosaic.version = 11 : i64} {
  func.func @_decoder_block_kernel(%arg0: i32, %arg1: memref<64x256xf32, #tpu.memory_space<vmem>>, %arg2: memref<9x1x512xf32, #tpu.memory_space<vmem>>, %arg3: memref<1x2x8x64xf32, #tpu.memory_space<vmem>>, %arg4: memref<1x2x4x256xf32, #tpu.memory_space<vmem>>, %arg5: memref<72x12xf32, #tpu.memory_space<vmem>>, %arg6: memref<72x8xf32, #tpu.memory_space<vmem>>, %arg7: memref<8x1xf32, #tpu.memory_space<vmem>>, %arg8: memref<8x1xf32, #tpu.memory_space<vmem>>, %arg9: memref<1x2x4x256xf32, #tpu.memory_space<vmem>>) attributes {dimension_semantics = [#tpu.dimension_semantics<parallel>], iteration_bounds = array<i64: 2>, scalar_prefetch = 0 : i64, scratch_operands = 0 : i64, tpu.core_type = #tpu.core_type<tc>, window_params = [{pipeline_mode = #tpu.pipeline_mode<synchronous>, transform_indices = @transform_0, window_bounds = array<i64: 64, 256>}, {pipeline_mode = #tpu.pipeline_mode<synchronous>, transform_indices = @transform_1, window_bounds = array<i64: 9, 1, 512>}, {transform_indices = @transform_2, window_bounds = array<i64: 1, 2, 8, 64>}, {transform_indices = @transform_3, window_bounds = array<i64: 1, 2, 4, 256>}, {pipeline_mode = #tpu.pipeline_mode<synchronous>, transform_indices = @transform_4, window_bounds = array<i64: 72, 12>}, {pipeline_mode = #tpu.pipeline_mode<synchronous>, transform_indices = @transform_5, window_bounds = array<i64: 72, 8>}, {pipeline_mode = #tpu.pipeline_mode<synchronous>, transform_indices = @transform_6, window_bounds = array<i64: 8, 1>}, {pipeline_mode = #tpu.pipeline_mode<synchronous>, transform_indices = @transform_7, window_bounds = array<i64: 8, 1>}, {transform_indices = @transform_8, window_bounds = array<i64: 1, 2, 4, 256>}]} {
    %c0 = arith.constant 0 : index
    %c0_0 = arith.constant 0 : index
    %0 = vector.load %arg1[%c0, %c0_0] : memref<64x256xf32, #tpu.memory_space<vmem>>, vector<64x256xf32>
    %c0_1 = arith.constant 0 : index
    %c0_2 = arith.constant 0 : index
    %c0_3 = arith.constant 0 : index
    %c0_4 = arith.constant 0 : index
    %1 = vector.load %arg3[%c0_1, %c0_2, %c0_3, %c0_4] : memref<1x2x8x64xf32, #tpu.memory_space<vmem>>, vector<1x1x8x64xf32>
    %2 = vector.shape_cast %1 : vector<1x1x8x64xf32> to vector<8x64xf32>
    %cst = arith.constant dense<0.000000e+00> : vector<8x256xf32>
    %3 = tpu.matmul %2, %0, %cst {dimension_numbers = #tpu.dot_dimension_numbers<[1], [0], [0], [1], [0, 0, 1, 1], [], []>} : vector<8x64xf32>, vector<64x256xf32>, vector<8x256xf32> -> vector<8x256xf32>
    %c0_5 = arith.constant 0 : index
    %c1 = arith.constant 1 : index
    %c0_6 = arith.constant 0 : index
    %c0_7 = arith.constant 0 : index
    %4 = vector.load %arg3[%c0_5, %c1, %c0_6, %c0_7] : memref<1x2x8x64xf32, #tpu.memory_space<vmem>>, vector<1x1x8x64xf32>
    %5 = vector.shape_cast %4 : vector<1x1x8x64xf32> to vector<8x64xf32>
    %cst_8 = arith.constant dense<0.000000e+00> : vector<8x256xf32>
    %6 = tpu.matmul %5, %0, %cst_8 {dimension_numbers = #tpu.dot_dimension_numbers<[1], [0], [0], [1], [0, 0, 1, 1], [], []>} : vector<8x64xf32>, vector<64x256xf32>, vector<8x256xf32> -> vector<8x256xf32>
    %c0_9 = arith.constant 0 : index
    %c0_10 = arith.constant 0 : index
    %c0_11 = arith.constant 0 : index
    %c0_12 = arith.constant 0 : index
    %7 = vector.load %arg4[%c0_9, %c0_10, %c0_11, %c0_12] : memref<1x2x4x256xf32, #tpu.memory_space<vmem>>, vector<1x1x4x256xf32>
    %8 = vector.shape_cast %7 : vector<1x1x4x256xf32> to vector<4x256xf32>
    %c0_13 = arith.constant 0 : index
    %c1_14 = arith.constant 1 : index
    %c0_15 = arith.constant 0 : index
    %c0_16 = arith.constant 0 : index
    %9 = vector.load %arg4[%c0_13, %c1_14, %c0_15, %c0_16] : memref<1x2x4x256xf32, #tpu.memory_space<vmem>>, vector<1x1x4x256xf32>
    %10 = vector.shape_cast %9 : vector<1x1x4x256xf32> to vector<4x256xf32>
    %11 = tpu.concatenate %3, %6 in 1 : vector<8x256xf32>, vector<8x256xf32> -> vector<8x512xf32>
    %12 = tpu.concatenate %8, %10 in 1 : vector<4x256xf32>, vector<4x256xf32> -> vector<4x512xf32>
    %13 = tpu.concatenate %11, %12 in 0 : vector<8x512xf32>, vector<4x512xf32> -> vector<12x512xf32>
    %c0_17 = arith.constant 0 : index
    %c0_18 = arith.constant 0 : index
    %14 = vector.load %arg5[%c0_17, %c0_18] : memref<72x12xf32, #tpu.memory_space<vmem>>, vector<72x12xf32>
    %cst_19 = arith.constant dense<0.000000e+00> : vector<72x512xf32>
    %15 = tpu.matmul %14, %13, %cst_19 {dimension_numbers = #tpu.dot_dimension_numbers<[1], [0], [0], [1], [0, 0, 1, 1], [], []>} : vector<72x12xf32>, vector<12x512xf32>, vector<72x512xf32> -> vector<72x512xf32>
    %c0_20 = arith.constant 0 : index
    %c0_21 = arith.constant 0 : index
    %16 = vector.load %arg7[%c0_20, %c0_21] : memref<8x1xf32, #tpu.memory_space<vmem>>, vector<8x1xf32>
    %17 = vector.shape_cast %16 : vector<8x1xf32> to vector<8x1xf32>
    %18 = vector.broadcast %17 : vector<8x1xf32> to vector<8x512xf32>
    %19 = vector.extract_strided_slice %15 {offsets = [0, 0], sizes = [8, 512], strides = [1, 1]} : vector<72x512xf32> to vector<8x512xf32>
    %c17_i32 = arith.constant 17 : i32
    %20 = tpu.dynamic_rotate %19 by %c17_i32 dim 1 : vector<8x512xf32>, i32 -> vector<8x512xf32>
    %c0_22 = arith.constant 0 : index
    %c0_23 = arith.constant 0 : index
    %c0_24 = arith.constant 0 : index
    %21 = vector.load %arg2[%c0_22, %c0_23, %c0_24] : memref<9x1x512xf32, #tpu.memory_space<vmem>>, vector<1x1x512xf32>
    %22 = vector.shape_cast %21 : vector<1x1x512xf32> to vector<1x512xf32>
    %23 = vector.broadcast %22 : vector<1x512xf32> to vector<8x512xf32>
    %24 = arith.mulf %20, %23 : vector<8x512xf32>
    %25 = arith.addf %18, %24 : vector<8x512xf32>
    %26 = vector.extract_strided_slice %15 {offsets = [8, 0], sizes = [8, 512], strides = [1, 1]} : vector<72x512xf32> to vector<8x512xf32>
    %c16_i32 = arith.constant 16 : i32
    %27 = tpu.dynamic_rotate %26 by %c16_i32 dim 1 : vector<8x512xf32>, i32 -> vector<8x512xf32>
    %c1_25 = arith.constant 1 : index
    %c0_26 = arith.constant 0 : index
    %c0_27 = arith.constant 0 : index
    %28 = vector.load %arg2[%c1_25, %c0_26, %c0_27] : memref<9x1x512xf32, #tpu.memory_space<vmem>>, vector<1x1x512xf32>
    %29 = vector.shape_cast %28 : vector<1x1x512xf32> to vector<1x512xf32>
    %30 = vector.broadcast %29 : vector<1x512xf32> to vector<8x512xf32>
    %31 = arith.mulf %27, %30 : vector<8x512xf32>
    %32 = arith.addf %25, %31 : vector<8x512xf32>
    %33 = vector.extract_strided_slice %15 {offsets = [16, 0], sizes = [8, 512], strides = [1, 1]} : vector<72x512xf32> to vector<8x512xf32>
    %c15_i32 = arith.constant 15 : i32
    %34 = tpu.dynamic_rotate %33 by %c15_i32 dim 1 : vector<8x512xf32>, i32 -> vector<8x512xf32>
    %c2 = arith.constant 2 : index
    %c0_28 = arith.constant 0 : index
    %c0_29 = arith.constant 0 : index
    %35 = vector.load %arg2[%c2, %c0_28, %c0_29] : memref<9x1x512xf32, #tpu.memory_space<vmem>>, vector<1x1x512xf32>
    %36 = vector.shape_cast %35 : vector<1x1x512xf32> to vector<1x512xf32>
    %37 = vector.broadcast %36 : vector<1x512xf32> to vector<8x512xf32>
    %38 = arith.mulf %34, %37 : vector<8x512xf32>
    %39 = arith.addf %32, %38 : vector<8x512xf32>
    %40 = vector.extract_strided_slice %15 {offsets = [24, 0], sizes = [8, 512], strides = [1, 1]} : vector<72x512xf32> to vector<8x512xf32>
    %c1_i32 = arith.constant 1 : i32
    %41 = tpu.dynamic_rotate %40 by %c1_i32 dim 1 : vector<8x512xf32>, i32 -> vector<8x512xf32>
    %c3 = arith.constant 3 : index
    %c0_30 = arith.constant 0 : index
    %c0_31 = arith.constant 0 : index
    %42 = vector.load %arg2[%c3, %c0_30, %c0_31] : memref<9x1x512xf32, #tpu.memory_space<vmem>>, vector<1x1x512xf32>
    %43 = vector.shape_cast %42 : vector<1x1x512xf32> to vector<1x512xf32>
    %44 = vector.broadcast %43 : vector<1x512xf32> to vector<8x512xf32>
    %45 = arith.mulf %41, %44 : vector<8x512xf32>
    %46 = arith.addf %39, %45 : vector<8x512xf32>
    %47 = vector.extract_strided_slice %15 {offsets = [32, 0], sizes = [8, 512], strides = [1, 1]} : vector<72x512xf32> to vector<8x512xf32>
    %48 = arith.addf %46, %47 : vector<8x512xf32>
    %49 = vector.extract_strided_slice %15 {offsets = [40, 0], sizes = [8, 512], strides = [1, 1]} : vector<72x512xf32> to vector<8x512xf32>
    %c511_i32 = arith.constant 511 : i32
    %50 = tpu.dynamic_rotate %49 by %c511_i32 dim 1 : vector<8x512xf32>, i32 -> vector<8x512xf32>
    %c5 = arith.constant 5 : index
    %c0_32 = arith.constant 0 : index
    %c0_33 = arith.constant 0 : index
    %51 = vector.load %arg2[%c5, %c0_32, %c0_33] : memref<9x1x512xf32, #tpu.memory_space<vmem>>, vector<1x1x512xf32>
    %52 = vector.shape_cast %51 : vector<1x1x512xf32> to vector<1x512xf32>
    %53 = vector.broadcast %52 : vector<1x512xf32> to vector<8x512xf32>
    %54 = arith.mulf %50, %53 : vector<8x512xf32>
    %55 = arith.addf %48, %54 : vector<8x512xf32>
    %56 = vector.extract_strided_slice %15 {offsets = [48, 0], sizes = [8, 512], strides = [1, 1]} : vector<72x512xf32> to vector<8x512xf32>
    %c497_i32 = arith.constant 497 : i32
    %57 = tpu.dynamic_rotate %56 by %c497_i32 dim 1 : vector<8x512xf32>, i32 -> vector<8x512xf32>
    %c6 = arith.constant 6 : index
    %c0_34 = arith.constant 0 : index
    %c0_35 = arith.constant 0 : index
    %58 = vector.load %arg2[%c6, %c0_34, %c0_35] : memref<9x1x512xf32, #tpu.memory_space<vmem>>, vector<1x1x512xf32>
    %59 = vector.shape_cast %58 : vector<1x1x512xf32> to vector<1x512xf32>
    %60 = vector.broadcast %59 : vector<1x512xf32> to vector<8x512xf32>
    %61 = arith.mulf %57, %60 : vector<8x512xf32>
    %62 = arith.addf %55, %61 : vector<8x512xf32>
    %63 = vector.extract_strided_slice %15 {offsets = [56, 0], sizes = [8, 512], strides = [1, 1]} : vector<72x512xf32> to vector<8x512xf32>
    %c496_i32 = arith.constant 496 : i32
    %64 = tpu.dynamic_rotate %63 by %c496_i32 dim 1 : vector<8x512xf32>, i32 -> vector<8x512xf32>
    %c7 = arith.constant 7 : index
    %c0_36 = arith.constant 0 : index
    %c0_37 = arith.constant 0 : index
    %65 = vector.load %arg2[%c7, %c0_36, %c0_37] : memref<9x1x512xf32, #tpu.memory_space<vmem>>, vector<1x1x512xf32>
    %66 = vector.shape_cast %65 : vector<1x1x512xf32> to vector<1x512xf32>
    %67 = vector.broadcast %66 : vector<1x512xf32> to vector<8x512xf32>
    %68 = arith.mulf %64, %67 : vector<8x512xf32>
    %69 = arith.addf %62, %68 : vector<8x512xf32>
    %70 = vector.extract_strided_slice %15 {offsets = [64, 0], sizes = [8, 512], strides = [1, 1]} : vector<72x512xf32> to vector<8x512xf32>
    %c495_i32 = arith.constant 495 : i32
    %71 = tpu.dynamic_rotate %70 by %c495_i32 dim 1 : vector<8x512xf32>, i32 -> vector<8x512xf32>
    %c8 = arith.constant 8 : index
    %c0_38 = arith.constant 0 : index
    %c0_39 = arith.constant 0 : index
    %72 = vector.load %arg2[%c8, %c0_38, %c0_39] : memref<9x1x512xf32, #tpu.memory_space<vmem>>, vector<1x1x512xf32>
    %73 = vector.shape_cast %72 : vector<1x1x512xf32> to vector<1x512xf32>
    %74 = vector.broadcast %73 : vector<1x512xf32> to vector<8x512xf32>
    %75 = arith.mulf %71, %74 : vector<8x512xf32>
    %76 = arith.addf %69, %75 : vector<8x512xf32>
    %cst_40 = arith.constant 0.000000e+00 : f32
    %77 = vector.broadcast %cst_40 : f32 to vector<8x512xf32>
    %78 = arith.maximumf %76, %77 : vector<8x512xf32>
    %c0_41 = arith.constant 0 : index
    %c0_42 = arith.constant 0 : index
    %79 = vector.load %arg6[%c0_41, %c0_42] : memref<72x8xf32, #tpu.memory_space<vmem>>, vector<72x8xf32>
    %cst_43 = arith.constant dense<0.000000e+00> : vector<72x512xf32>
    %80 = tpu.matmul %79, %78, %cst_43 {dimension_numbers = #tpu.dot_dimension_numbers<[1], [0], [0], [1], [0, 0, 1, 1], [], []>} : vector<72x8xf32>, vector<8x512xf32>, vector<72x512xf32> -> vector<72x512xf32>
    %c0_44 = arith.constant 0 : index
    %c0_45 = arith.constant 0 : index
    %81 = vector.load %arg8[%c0_44, %c0_45] : memref<8x1xf32, #tpu.memory_space<vmem>>, vector<8x1xf32>
    %82 = vector.shape_cast %81 : vector<8x1xf32> to vector<8x1xf32>
    %83 = vector.broadcast %82 : vector<8x1xf32> to vector<8x512xf32>
    %84 = vector.extract_strided_slice %80 {offsets = [0, 0], sizes = [8, 512], strides = [1, 1]} : vector<72x512xf32> to vector<8x512xf32>
    %c17_i32_46 = arith.constant 17 : i32
    %85 = tpu.dynamic_rotate %84 by %c17_i32_46 dim 1 : vector<8x512xf32>, i32 -> vector<8x512xf32>
    %c0_47 = arith.constant 0 : index
    %c0_48 = arith.constant 0 : index
    %c0_49 = arith.constant 0 : index
    %86 = vector.load %arg2[%c0_47, %c0_48, %c0_49] : memref<9x1x512xf32, #tpu.memory_space<vmem>>, vector<1x1x512xf32>
    %87 = vector.shape_cast %86 : vector<1x1x512xf32> to vector<1x512xf32>
    %88 = vector.broadcast %87 : vector<1x512xf32> to vector<8x512xf32>
    %89 = arith.mulf %85, %88 : vector<8x512xf32>
    %90 = arith.addf %83, %89 : vector<8x512xf32>
    %91 = vector.extract_strided_slice %80 {offsets = [8, 0], sizes = [8, 512], strides = [1, 1]} : vector<72x512xf32> to vector<8x512xf32>
    %c16_i32_50 = arith.constant 16 : i32
    %92 = tpu.dynamic_rotate %91 by %c16_i32_50 dim 1 : vector<8x512xf32>, i32 -> vector<8x512xf32>
    %c1_51 = arith.constant 1 : index
    %c0_52 = arith.constant 0 : index
    %c0_53 = arith.constant 0 : index
    %93 = vector.load %arg2[%c1_51, %c0_52, %c0_53] : memref<9x1x512xf32, #tpu.memory_space<vmem>>, vector<1x1x512xf32>
    %94 = vector.shape_cast %93 : vector<1x1x512xf32> to vector<1x512xf32>
    %95 = vector.broadcast %94 : vector<1x512xf32> to vector<8x512xf32>
    %96 = arith.mulf %92, %95 : vector<8x512xf32>
    %97 = arith.addf %90, %96 : vector<8x512xf32>
    %98 = vector.extract_strided_slice %80 {offsets = [16, 0], sizes = [8, 512], strides = [1, 1]} : vector<72x512xf32> to vector<8x512xf32>
    %c15_i32_54 = arith.constant 15 : i32
    %99 = tpu.dynamic_rotate %98 by %c15_i32_54 dim 1 : vector<8x512xf32>, i32 -> vector<8x512xf32>
    %c2_55 = arith.constant 2 : index
    %c0_56 = arith.constant 0 : index
    %c0_57 = arith.constant 0 : index
    %100 = vector.load %arg2[%c2_55, %c0_56, %c0_57] : memref<9x1x512xf32, #tpu.memory_space<vmem>>, vector<1x1x512xf32>
    %101 = vector.shape_cast %100 : vector<1x1x512xf32> to vector<1x512xf32>
    %102 = vector.broadcast %101 : vector<1x512xf32> to vector<8x512xf32>
    %103 = arith.mulf %99, %102 : vector<8x512xf32>
    %104 = arith.addf %97, %103 : vector<8x512xf32>
    %105 = vector.extract_strided_slice %80 {offsets = [24, 0], sizes = [8, 512], strides = [1, 1]} : vector<72x512xf32> to vector<8x512xf32>
    %c1_i32_58 = arith.constant 1 : i32
    %106 = tpu.dynamic_rotate %105 by %c1_i32_58 dim 1 : vector<8x512xf32>, i32 -> vector<8x512xf32>
    %c3_59 = arith.constant 3 : index
    %c0_60 = arith.constant 0 : index
    %c0_61 = arith.constant 0 : index
    %107 = vector.load %arg2[%c3_59, %c0_60, %c0_61] : memref<9x1x512xf32, #tpu.memory_space<vmem>>, vector<1x1x512xf32>
    %108 = vector.shape_cast %107 : vector<1x1x512xf32> to vector<1x512xf32>
    %109 = vector.broadcast %108 : vector<1x512xf32> to vector<8x512xf32>
    %110 = arith.mulf %106, %109 : vector<8x512xf32>
    %111 = arith.addf %104, %110 : vector<8x512xf32>
    %112 = vector.extract_strided_slice %80 {offsets = [32, 0], sizes = [8, 512], strides = [1, 1]} : vector<72x512xf32> to vector<8x512xf32>
    %113 = arith.addf %111, %112 : vector<8x512xf32>
    %114 = vector.extract_strided_slice %80 {offsets = [40, 0], sizes = [8, 512], strides = [1, 1]} : vector<72x512xf32> to vector<8x512xf32>
    %c511_i32_62 = arith.constant 511 : i32
    %115 = tpu.dynamic_rotate %114 by %c511_i32_62 dim 1 : vector<8x512xf32>, i32 -> vector<8x512xf32>
    %c5_63 = arith.constant 5 : index
    %c0_64 = arith.constant 0 : index
    %c0_65 = arith.constant 0 : index
    %116 = vector.load %arg2[%c5_63, %c0_64, %c0_65] : memref<9x1x512xf32, #tpu.memory_space<vmem>>, vector<1x1x512xf32>
    %117 = vector.shape_cast %116 : vector<1x1x512xf32> to vector<1x512xf32>
    %118 = vector.broadcast %117 : vector<1x512xf32> to vector<8x512xf32>
    %119 = arith.mulf %115, %118 : vector<8x512xf32>
    %120 = arith.addf %113, %119 : vector<8x512xf32>
    %121 = vector.extract_strided_slice %80 {offsets = [48, 0], sizes = [8, 512], strides = [1, 1]} : vector<72x512xf32> to vector<8x512xf32>
    %c497_i32_66 = arith.constant 497 : i32
    %122 = tpu.dynamic_rotate %121 by %c497_i32_66 dim 1 : vector<8x512xf32>, i32 -> vector<8x512xf32>
    %c6_67 = arith.constant 6 : index
    %c0_68 = arith.constant 0 : index
    %c0_69 = arith.constant 0 : index
    %123 = vector.load %arg2[%c6_67, %c0_68, %c0_69] : memref<9x1x512xf32, #tpu.memory_space<vmem>>, vector<1x1x512xf32>
    %124 = vector.shape_cast %123 : vector<1x1x512xf32> to vector<1x512xf32>
    %125 = vector.broadcast %124 : vector<1x512xf32> to vector<8x512xf32>
    %126 = arith.mulf %122, %125 : vector<8x512xf32>
    %127 = arith.addf %120, %126 : vector<8x512xf32>
    %128 = vector.extract_strided_slice %80 {offsets = [56, 0], sizes = [8, 512], strides = [1, 1]} : vector<72x512xf32> to vector<8x512xf32>
    %c496_i32_70 = arith.constant 496 : i32
    %129 = tpu.dynamic_rotate %128 by %c496_i32_70 dim 1 : vector<8x512xf32>, i32 -> vector<8x512xf32>
    %c7_71 = arith.constant 7 : index
    %c0_72 = arith.constant 0 : index
    %c0_73 = arith.constant 0 : index
    %130 = vector.load %arg2[%c7_71, %c0_72, %c0_73] : memref<9x1x512xf32, #tpu.memory_space<vmem>>, vector<1x1x512xf32>
    %131 = vector.shape_cast %130 : vector<1x1x512xf32> to vector<1x512xf32>
    %132 = vector.broadcast %131 : vector<1x512xf32> to vector<8x512xf32>
    %133 = arith.mulf %129, %132 : vector<8x512xf32>
    %134 = arith.addf %127, %133 : vector<8x512xf32>
    %135 = vector.extract_strided_slice %80 {offsets = [64, 0], sizes = [8, 512], strides = [1, 1]} : vector<72x512xf32> to vector<8x512xf32>
    %c495_i32_74 = arith.constant 495 : i32
    %136 = tpu.dynamic_rotate %135 by %c495_i32_74 dim 1 : vector<8x512xf32>, i32 -> vector<8x512xf32>
    %c8_75 = arith.constant 8 : index
    %c0_76 = arith.constant 0 : index
    %c0_77 = arith.constant 0 : index
    %137 = vector.load %arg2[%c8_75, %c0_76, %c0_77] : memref<9x1x512xf32, #tpu.memory_space<vmem>>, vector<1x1x512xf32>
    %138 = vector.shape_cast %137 : vector<1x1x512xf32> to vector<1x512xf32>
    %139 = vector.broadcast %138 : vector<1x512xf32> to vector<8x512xf32>
    %140 = arith.mulf %136, %139 : vector<8x512xf32>
    %141 = arith.addf %134, %140 : vector<8x512xf32>
    %cst_78 = arith.constant 0.000000e+00 : f32
    %142 = vector.broadcast %cst_78 : f32 to vector<8x512xf32>
    %143 = arith.maximumf %141, %142 : vector<8x512xf32>
    %144 = vector.extract_strided_slice %143 {offsets = [0, 0], sizes = [4, 256], strides = [1, 1]} : vector<8x512xf32> to vector<4x256xf32>
    %c0_79 = arith.constant 0 : index
    %c0_80 = arith.constant 0 : index
    %c0_81 = arith.constant 0 : index
    %c0_82 = arith.constant 0 : index
    %145 = vector.load %arg9[%c0_79, %c0_80, %c0_81, %c0_82] : memref<1x2x4x256xf32, #tpu.memory_space<vmem>>, vector<1x1x4x256xf32>
    %146 = vector.shape_cast %145 : vector<1x1x4x256xf32> to vector<4x256xf32>
    %147 = vector.shape_cast %144 : vector<4x256xf32> to vector<1x1x4x256xf32>
    tpu.vector_store %arg9[%c0_79, %c0_80, %c0_81, %c0_82], %147 {strides = array<i32>} : memref<1x2x4x256xf32, #tpu.memory_space<vmem>>, vector<1x1x4x256xf32>,
    %148 = vector.extract_strided_slice %143 {offsets = [0, 256], sizes = [4, 256], strides = [1, 1]} : vector<8x512xf32> to vector<4x256xf32>
    %c0_83 = arith.constant 0 : index
    %c1_84 = arith.constant 1 : index
    %c0_85 = arith.constant 0 : index
    %c0_86 = arith.constant 0 : index
    %149 = vector.load %arg9[%c0_83, %c1_84, %c0_85, %c0_86] : memref<1x2x4x256xf32, #tpu.memory_space<vmem>>, vector<1x1x4x256xf32>
    %150 = vector.shape_cast %149 : vector<1x1x4x256xf32> to vector<4x256xf32>
    %151 = vector.shape_cast %148 : vector<4x256xf32> to vector<1x1x4x256xf32>
    tpu.vector_store %arg9[%c0_83, %c1_84, %c0_85, %c0_86], %151 {strides = array<i32>} : memref<1x2x4x256xf32, #tpu.memory_space<vmem>>, vector<1x1x4x256xf32>,
    return
  }
  func.func @transform_0(%arg0: i32) -> (i32, i32) {
    %c0_i32 = arith.constant 0 : i32
    %c0_i32_0 = arith.constant 0 : i32
    %c0_i32_1 = arith.constant 0 : i32
    return %c0_i32, %c0_i32_0 : i32, i32
  }
  func.func @transform_1(%arg0: i32) -> (i32, i32, i32) {
    %c0_i32 = arith.constant 0 : i32
    %c0_i32_0 = arith.constant 0 : i32
    %c0_i32_1 = arith.constant 0 : i32
    %c0_i32_2 = arith.constant 0 : i32
    return %c0_i32, %c0_i32_0, %c0_i32_1 : i32, i32, i32
  }
  func.func @transform_2(%arg0: i32) -> (i32, i32, i32, i32) {
    %c0_i32 = arith.constant 0 : i32
    %c0_i32_0 = arith.constant 0 : i32
    %c0_i32_1 = arith.constant 0 : i32
    %c0_i32_2 = arith.constant 0 : i32
    return %arg0, %c0_i32, %c0_i32_0, %c0_i32_1 : i32, i32, i32, i32
  }
  func.func @transform_3(%arg0: i32) -> (i32, i32, i32, i32) {
    %c0_i32 = arith.constant 0 : i32
    %c0_i32_0 = arith.constant 0 : i32
    %c0_i32_1 = arith.constant 0 : i32
    %c0_i32_2 = arith.constant 0 : i32
    return %arg0, %c0_i32, %c0_i32_0, %c0_i32_1 : i32, i32, i32, i32
  }
  func.func @transform_4(%arg0: i32) -> (i32, i32) {
    %c0_i32 = arith.constant 0 : i32
    %c0_i32_0 = arith.constant 0 : i32
    %c0_i32_1 = arith.constant 0 : i32
    return %c0_i32, %c0_i32_0 : i32, i32
  }
  func.func @transform_5(%arg0: i32) -> (i32, i32) {
    %c0_i32 = arith.constant 0 : i32
    %c0_i32_0 = arith.constant 0 : i32
    %c0_i32_1 = arith.constant 0 : i32
    return %c0_i32, %c0_i32_0 : i32, i32
  }
  func.func @transform_6(%arg0: i32) -> (i32, i32) {
    %c0_i32 = arith.constant 0 : i32
    %c0_i32_0 = arith.constant 0 : i32
    %c0_i32_1 = arith.constant 0 : i32
    return %c0_i32, %c0_i32_0 : i32, i32
  }
  func.func @transform_7(%arg0: i32) -> (i32, i32) {
    %c0_i32 = arith.constant 0 : i32
    %c0_i32_0 = arith.constant 0 : i32
    %c0_i32_1 = arith.constant 0 : i32
    return %c0_i32, %c0_i32_0 : i32, i32
  }
  func.func @transform_8(%arg0: i32) -> (i32, i32, i32, i32) {
    %c0_i32 = arith.constant 0 : i32
    %c0_i32_0 = arith.constant 0 : i32
    %c0_i32_1 = arith.constant 0 : i32
    %c0_i32_2 = arith.constant 0 : i32
    return %arg0, %c0_i32, %c0_i32_0, %c0_i32_1 : i32, i32, i32, i32
  }
}

</mosaic_0001>

<llo_original>
// kernel: decoder_block_forward.1
$region0: #{decoder_block_forward.1}
  #allocation0 [shape = 'u32[]', space=smem, size = 0x4, offset = 0x4, fixed_abs, tag = 'smem constant byte address 0x4 - core index']
  #allocation1 [shape = 'u32[72,128]{1,0:T(1,128)}', space=vmem, size = 0x9000, scoped, tag = 'internal scratch']
  %s0 = inlined_call_operand.vmem [shape: f32[64,256], index: 0, kind: input, shape index: {}]
  %s1 = inlined_call_operand.vmem [shape: f32[9,1,512], index: 1, kind: input, shape index: {}]
  %s2 = inlined_call_operand.vmem [shape: f32[2,2,8,64], index: 2, kind: input, shape index: {}]
  %s3 = inlined_call_operand.vmem [shape: f32[2,2,4,256], index: 3, kind: input, shape index: {}]
  %s4 = inlined_call_operand.vmem [shape: f32[72,12], index: 4, kind: input, shape index: {}]
  %s5 = inlined_call_operand.vmem [shape: f32[72,8], index: 5, kind: input, shape index: {}]
  %s6 = inlined_call_operand.vmem [shape: f32[8,1], index: 6, kind: input, shape index: {}]
  %s7 = inlined_call_operand.vmem [shape: f32[8,1], index: 7, kind: input, shape index: {}]
  %s8 = inlined_call_operand.vmem [shape: f32[2,2,4,256], index: 8, kind: output, shape index: {}]
  %s9 = sld [smem:[#allocation0]]
  $region65: #{decoder_block_forward.1} parent=0
    _
  %s11 = ssub.s32 1, %s9
  %s12 = scalar_select 0, %s11, %s9
  loop: start=0, step=1, limit=4
  $region2: #{decoder_block_forward.1} parent=0 // loop_pre_header
    _
  $region3: #{decoder_block_forward.1} parent=0 // loop_header
    %s14 = sphi 0, %s18
    %p15 = scmp.ge.s32.totalorder %s14, 4
    %s22 = sphi 0, %s22
    %s24 = sphi 0, %s22
    %s25 = sphi 0, %s24
    %s39 = sphi 0, %s25
    %s43 = sphi 0, %s43
    %s45 = sphi 0, %s43
    %s46 = sphi 0, %s45
    %s60 = sphi 0, %s46
    %s66 = sphi 0, %s68
    %s69 = sphi 0, %s66
    %s70 = sphi 0, %s69
    %s86 = sphi 0, %s70
    %s92 = sphi 0, %s94
    %s95 = sphi 0, %s92
    %s96 = sphi 0, %s95
    %s112 = sphi 0, %s96
    %s116 = sphi 0, %s116
    %s118 = sphi 0, %s116
    %s119 = sphi 0, %s118
    %s133 = sphi 0, %s119
    %s137 = sphi 0, %s137
    %s139 = sphi 0, %s137
    %s140 = sphi 0, %s139
    %s154 = sphi 0, %s140
    %s158 = sphi 0, %s158
    %s160 = sphi 0, %s158
    %s161 = sphi 0, %s160
    %s175 = sphi 0, %s161
    %s179 = sphi 0, %s179
    %s181 = sphi 0, %s179
    %s182 = sphi 0, %s181
    %s196 = sphi 0, %s182
    %s202 = sphi 0, %s204
    %s205 = sphi 0, %s202
    %s206 = sphi 0, %s205
    %s222 = sphi 0, %s206
  $region4: #{decoder_block_forward.1} parent=0 // loop_header_branch
    %17 = sbr.rel (%p15) target = $region8
  $region5: #{decoder_block_forward.1} parent=0 // loop_body
    %s19 = ssub.s32 %s14, 1
    %s20 = ssub.s32 %s14, 2
    %s21 = sadd.s32 %s14, 1
    %s23 = sadd.s32 %s22, 1
    %p26 = scmp.eq.s32.totalorder %s14, 1
    %p27 = scmp.ne.s32.totalorder %s22, %s24
    %p28 = scmp.eq.s32.totalorder %s14, 0
    %p29 = por %p27, %p28
    %p30 = scmp.ne.s32.totalorder %s22, %s24
    %p31 = scmp.eq.s32.totalorder %s19, 1
    %p32 = por %p30, %p31
    %p33 = scmp.ne.s32.totalorder %s24, %s25
    %p34 = scmp.eq.s32.totalorder %s19, 0
    %p35 = por %p33, %p34
    %p36 = scmp.ne.s32.totalorder %s24, %s25
    %p37 = scmp.eq.s32.totalorder %s20, 1
    %p38 = por %p36, %p37
    %p40 = scmp.ne.s32.totalorder %s25, %s39
    %p41 = scmp.eq.s32.totalorder %s20, 0
    %p42 = por %p40, %p41
    %s44 = sadd.s32 %s43, 1
    %p47 = scmp.eq.s32.totalorder %s14, 1
    %p48 = scmp.ne.s32.totalorder %s43, %s45
    %p49 = scmp.eq.s32.totalorder %s14, 0
    %p50 = por %p48, %p49
    %p51 = scmp.ne.s32.totalorder %s43, %s45
    %p52 = scmp.eq.s32.totalorder %s19, 1
    %p53 = por %p51, %p52
    %p54 = scmp.ne.s32.totalorder %s45, %s46
    %p55 = scmp.eq.s32.totalorder %s19, 0
    %p56 = por %p54, %p55
    %p57 = scmp.ne.s32.totalorder %s45, %s46
    %p58 = scmp.eq.s32.totalorder %s20, 1
    %p59 = por %p57, %p58
    %p61 = scmp.ne.s32.totalorder %s46, %s60
    %p62 = scmp.eq.s32.totalorder %s20, 0
    %p63 = por %p61, %p62
    %s64 = ssub.s32 %s14, %s21
    %p65 = scmp.eq.s32.totalorder %s64, 0
    %s67 = sadd.s32 %s66, 1
    %s68 = scalar_select %p65, %s66, %s67
    %p71 = pneg %p65
    %p72 = scmp.eq.s32.totalorder %s14, 1
    %p73 = por %p71, %p72
    %p74 = scmp.ne.s32.totalorder %s66, %s69
    %p75 = scmp.eq.s32.totalorder %s14, 0
    %p76 = por %p74, %p75
    %p77 = scmp.ne.s32.totalorder %s66, %s69
    %p78 = scmp.eq.s32.totalorder %s19, 1
    %p79 = por %p77, %p78
    %p80 = scmp.ne.s32.totalorder %s69, %s70
    %p81 = scmp.eq.s32.totalorder %s19, 0
    %p82 = por %p80, %p81
    %p83 = scmp.ne.s32.totalorder %s69, %s70
    %p84 = scmp.eq.s32.totalorder %s20, 1
    %p85 = por %p83, %p84
    %p87 = scmp.ne.s32.totalorder %s70, %s86
    %p88 = scmp.eq.s32.totalorder %s20, 0
    %p89 = por %p87, %p88
    %s90 = ssub.s32 %s14, %s21
    %p91 = scmp.eq.s32.totalorder %s90, 0
    %s93 = sadd.s32 %s92, 1
    %s94 = scalar_select %p91, %s92, %s93
    %p97 = pneg %p91
    %p98 = scmp.eq.s32.totalorder %s14, 1
    %p99 = por %p97, %p98
    %p100 = scmp.ne.s32.totalorder %s92, %s95
    %p101 = scmp.eq.s32.totalorder %s14, 0
    %p102 = por %p100, %p101
    %p103 = scmp.ne.s32.totalorder %s92, %s95
    %p104 = scmp.eq.s32.totalorder %s19, 1
    %p105 = por %p103, %p104
    %p106 = scmp.ne.s32.totalorder %s95, %s96
    %p107 = scmp.eq.s32.totalorder %s19, 0
    %p108 = por %p106, %p107
    %p109 = scmp.ne.s32.totalorder %s95, %s96
    %p110 = scmp.eq.s32.totalorder %s20, 1
    %p111 = por %p109, %p110
    %p113 = scmp.ne.s32.totalorder %s96, %s112
    %p114 = scmp.eq.s32.totalorder %s20, 0
    %p115 = por %p113, %p114
    %s117 = sadd.s32 %s116, 1
    %p120 = scmp.eq.s32.totalorder %s14, 1
    %p121 = scmp.ne.s32.totalorder %s116, %s118
    %p122 = scmp.eq.s32.totalorder %s14, 0
    %p123 = por %p121, %p122
    %p124 = scmp.ne.s32.totalorder %s116, %s118
    %p125 = scmp.eq.s32.totalorder %s19, 1
    %p126 = por %p124, %p125
    %p127 = scmp.ne.s32.totalorder %s118, %s119
    %p128 = scmp.eq.s32.totalorder %s19, 0
    %p129 = por %p127, %p128
    %p130 = scmp.ne.s32.totalorder %s118, %s119
    %p131 = scmp.eq.s32.totalorder %s20, 1
    %p132 = por %p130, %p131
    %p134 = scmp.ne.s32.totalorder %s119, %s133
    %p135 = scmp.eq.s32.totalorder %s20, 0
    %p136 = por %p134, %p135
    %s138 = sadd.s32 %s137, 1
    %p141 = scmp.eq.s32.totalorder %s14, 1
    %p142 = scmp.ne.s32.totalorder %s137, %s139
    %p143 = scmp.eq.s32.totalorder %s14, 0
    %p144 = por %p142, %p143
    %p145 = scmp.ne.s32.totalorder %s137, %s139
    %p146 = scmp.eq.s32.totalorder %s19, 1
    %p147 = por %p145, %p146
    %p148 = scmp.ne.s32.totalorder %s139, %s140
    %p149 = scmp.eq.s32.totalorder %s19, 0
    %p150 = por %p148, %p149
    %p151 = scmp.ne.s32.totalorder %s139, %s140
    %p152 = scmp.eq.s32.totalorder %s20, 1
    %p153 = por %p151, %p152
    %p155 = scmp.ne.s32.totalorder %s140, %s154
    %p156 = scmp.eq.s32.totalorder %s20, 0
    %p157 = por %p155, %p156
    %s159 = sadd.s32 %s158, 1
    %p162 = scmp.eq.s32.totalorder %s14, 1
    %p163 = scmp.ne.s32.totalorder %s158, %s160
    %p164 = scmp.eq.s32.totalorder %s14, 0
    %p165 = por %p163, %p164
    %p166 = scmp.ne.s32.totalorder %s158, %s160
    %p167 = scmp.eq.s32.totalorder %s19, 1
    %p168 = por %p166, %p167
    %p169 = scmp.ne.s32.totalorder %s160, %s161
    %p170 = scmp.eq.s32.totalorder %s19, 0
    %p171 = por %p169, %p170
    %p172 = scmp.ne.s32.totalorder %s160, %s161
    %p173 = scmp.eq.s32.totalorder %s20, 1
    %p174 = por %p172, %p173
    %p176 = scmp.ne.s32.totalorder %s161, %s175
    %p177 = scmp.eq.s32.totalorder %s20, 0
    %p178 = por %p176, %p177
    %s180 = sadd.s32 %s179, 1
    %p183 = scmp.eq.s32.totalorder %s14, 1
    %p184 = scmp.ne.s32.totalorder %s179, %s181
    %p185 = scmp.eq.s32.totalorder %s14, 0
    %p186 = por %p184, %p185
    %p187 = scmp.ne.s32.totalorder %s179, %s181
    %p188 = scmp.eq.s32.totalorder %s19, 1
    %p189 = por %p187, %p188
    %p190 = scmp.ne.s32.totalorder %s181, %s182
    %p191 = scmp.eq.s32.totalorder %s19, 0
    %p192 = por %p190, %p191
    %p193 = scmp.ne.s32.totalorder %s181, %s182
    %p194 = scmp.eq.s32.totalorder %s20, 1
    %p195 = por %p193, %p194
    %p197 = scmp.ne.s32.totalorder %s182, %s196
    %p198 = scmp.eq.s32.totalorder %s20, 0
    %p199 = por %p197, %p198
    %s200 = ssub.s32 %s14, %s21
    %p201 = scmp.eq.s32.totalorder %s200, 0
    %s203 = sadd.s32 %s202, 1
    %s204 = scalar_select %p201, %s202, %s203
    %p207 = pneg %p201
    %p208 = scmp.eq.s32.totalorder %s14, 1
    %p209 = por %p207, %p208
    %p210 = scmp.ne.s32.totalorder %s202, %s205
    %p211 = scmp.eq.s32.totalorder %s14, 0
    %p212 = por %p210, %p211
    %p213 = scmp.ne.s32.totalorder %s202, %s205
    %p214 = scmp.eq.s32.totalorder %s19, 1
    %p215 = por %p213, %p214
    %p216 = scmp.ne.s32.totalorder %s205, %s206
    %p217 = scmp.eq.s32.totalorder %s19, 0
    %p218 = por %p216, %p217
    %p219 = scmp.ne.s32.totalorder %s205, %s206
    %p220 = scmp.eq.s32.totalorder %s20, 1
    %p221 = por %p219, %p220
    %p223 = scmp.ne.s32.totalorder %s206, %s222
    %p224 = scmp.eq.s32.totalorder %s20, 0
    %p225 = por %p223, %p224
    %p226 = scmp.le.s32.totalorder 1, %s14
    %p227 = scmp.lt.s32.totalorder %s14, 3
    %p228 = pnand %p226, %p227
    %p229 = pneg %p228
    // Predicated region
    $region9: #{decoder_block_forward.1} parent=5 // pred_check
      _
    $region10: #{decoder_block_forward.1} parent=5 // pred_check_branch
      %231 = sbr.rel (%p228) target = $region12
    $region11: #{decoder_block_forward.1} parent=5 // pred_region
      %s232 = ssub.s32 %s14, 1
      // Predicated region
      $region13: #{decoder_block_forward.1} parent=11 // pred_check
        %p233 = pneg %p35
      $region14: #{decoder_block_forward.1} parent=11 // pred_check_branch
        %235 = sbr.rel (%p233) target = $region16
      $region15: #{decoder_block_forward.1} parent=11 // pred_region
        _
      $region16: #{decoder_block_forward.1} parent=11 // pred_fallthru
        _
      // Predicated region
      $region17: #{decoder_block_forward.1} parent=11 // pred_check
        %p236 = pneg %p56
      $region18: #{decoder_block_forward.1} parent=11 // pred_check_branch
        %238 = sbr.rel (%p236) target = $region20
      $region19: #{decoder_block_forward.1} parent=11 // pred_region
        _
      $region20: #{decoder_block_forward.1} parent=11 // pred_fallthru
        _
      // Predicated region
      $region21: #{decoder_block_forward.1} parent=11 // pred_check
        %p239 = pneg %p129
      $region22: #{decoder_block_forward.1} parent=11 // pred_check_branch
        %241 = sbr.rel (%p239) target = $region24
      $region23: #{decoder_block_forward.1} parent=11 // pred_region
        _
      $region24: #{decoder_block_forward.1} parent=11 // pred_fallthru
        _
      // Predicated region
      $region25: #{decoder_block_forward.1} parent=11 // pred_check
        %p242 = pneg %p150
      $region26: #{decoder_block_forward.1} parent=11 // pred_check_branch
        %244 = sbr.rel (%p242) target = $region28
      $region27: #{decoder_block_forward.1} parent=11 // pred_region
        _
      $region28: #{decoder_block_forward.1} parent=11 // pred_fallthru
        _
      // Predicated region
      $region29: #{decoder_block_forward.1} parent=11 // pred_check
        %p245 = pneg %p171
      $region30: #{decoder_block_forward.1} parent=11 // pred_check_branch
        %247 = sbr.rel (%p245) target = $region32
      $region31: #{decoder_block_forward.1} parent=11 // pred_region
        _
      $region32: #{decoder_block_forward.1} parent=11 // pred_fallthru
        _
      // Predicated region
      $region33: #{decoder_block_forward.1} parent=11 // pred_check
        %p248 = pneg %p192
      $region34: #{decoder_block_forward.1} parent=11 // pred_check_branch
        %250 = sbr.rel (%p248) target = $region36
      $region35: #{decoder_block_forward.1} parent=11 // pred_region
        _
      $region36: #{decoder_block_forward.1} parent=11 // pred_fallthru
        _
    $region12: #{decoder_block_forward.1} parent=5 // pred_fallthru
      _
    %p251 = scmp.lt.s32.totalorder %s14, 2
    // Predicated region
    $region37: #{decoder_block_forward.1} parent=5 // pred_check
      %p252 = pneg %p251
    $region38: #{decoder_block_forward.1} parent=5 // pred_check_branch
      %254 = sbr.rel (%p252) target = $region40
    $region39: #{decoder_block_forward.1} parent=5 // pred_region
      // Predicated region
      $region41: #{decoder_block_forward.1} parent=39 // pred_check
        %p255 = pneg %p76
      $region42: #{decoder_block_forward.1} parent=39 // pred_check_branch
        %257 = sbr.rel (%p255) target = $region44
      $region43: #{decoder_block_forward.1} parent=39 // pred_region
        %p258 = scmp.lt.s32.totalorder %s14, 1
        %s259 = scalar_select %p258, %s14, 1
        %s260 = smul.addr %s259, 2
        %s261 = smul.addr %s260, 8
        %s262 = scalar_lea.vmem %s2, %s261
      $region44: #{decoder_block_forward.1} parent=39 // pred_fallthru
        _
      // Predicated region
      $region45: #{decoder_block_forward.1} parent=39 // pred_check
        %p263 = pneg %p102
      $region46: #{decoder_block_forward.1} parent=39 // pred_check_branch
        %265 = sbr.rel (%p263) target = $region48
      $region47: #{decoder_block_forward.1} parent=39 // pred_region
        %p266 = scmp.lt.s32.totalorder %s14, 1
        %s267 = scalar_select %p266, %s14, 1
        %s268 = smul.addr %s267, 4
        %s269 = smul.addr %s268, 4
        %s270 = scalar_lea.vmem %s3, %s269
      $region48: #{decoder_block_forward.1} parent=39 // pred_fallthru
        _
    $region40: #{decoder_block_forward.1} parent=5 // pred_fallthru
      _
    %p271 = scmp.le.s32.totalorder 1, %s14
    %p272 = scmp.lt.s32.totalorder %s14, 3
    %p273 = pnand %p271, %p272
    %p274 = pneg %p273
    // Predicated region
    $region49: #{decoder_block_forward.1} parent=5 // pred_check
      _
    $region50: #{decoder_block_forward.1} parent=5 // pred_check_branch
      %276 = sbr.rel (%p273) target = $region52
    $region51: #{decoder_block_forward.1} parent=5 // pred_region
      %s277 = ssub.s32 %s14, 1
      %p278 = pneg %p35
      %p279 = pneg %p32
      %p280 = pneg %p56
      %p281 = pneg %p53
      %p282 = scmp.lt.s32.totalorder %s19, 1
      %s283 = scalar_select %p282, %s19, 1
      %s284 = smul.addr %s283, 2
      %s285 = smul.addr %s284, 8
      %s286 = scalar_lea.vmem %s2, %s285
      %p287 = pneg %p82
      %p288 = pneg %p79
      %p289 = scmp.lt.s32.totalorder %s19, 1
      %s290 = scalar_select %p289, %s19, 1
      %s291 = smul.addr %s290, 4
      %s292 = smul.addr %s291, 4
      %s293 = scalar_lea.vmem %s3, %s292
      %p294 = pneg %p108
      %p295 = pneg %p105
      %p296 = pneg %p129
      %p297 = pneg %p126
      %p298 = pneg %p150
      %p299 = pneg %p147
      %p300 = pneg %p171
      %p301 = pneg %p168
      %p302 = pneg %p192
      %p303 = pneg %p189
      %p304 = pneg %p218
      %p305 = pneg %p215
      %p306 = scmp.lt.s32.totalorder %s19, 1
      %s307 = scalar_select %p306, %s19, 1
      %s308 = smul.addr %s307, 4
      %s309 = smul.addr %s308, 4
      %s310 = scalar_lea.vmem %s8, %s309
      %p311 = scmp.lt.s32.totalorder %s19, 1
      %s312 = scalar_select %p311, %s19, 1
      %s313 = smul.addr %s312, 2
      %s314 = smul.addr %s313, 8
      %s315 = scalar_lea.vmem %s2, %s314
      %p316 = scmp.lt.s32.totalorder %s19, 1
      %s317 = scalar_select %p316, %s19, 1
      %s318 = smul.addr %s317, 4
      %s319 = smul.addr %s318, 4
      %s320 = scalar_lea.vmem %s3, %s319
      %p321 = scmp.lt.s32.totalorder %s19, 1
      %s322 = scalar_select %p321, %s19, 1
      %s323 = smul.addr %s322, 4
      %s324 = smul.addr %s323, 4
      %s325 = scalar_lea.vmem %s8, %s324
      %v326 = vld [vmem:[%s0] sm:$0xff]
      %v327 = vld [vmem:[%s0 + $0x8] sm:$0xff]
      %v328 = vld [vmem:[%s0 + $0x10] sm:$0xff]
      %v329 = vld [vmem:[%s0 + $0x18] sm:$0xff]
      %v330 = vld [vmem:[%s0 + $0x20] sm:$0xff]
      %v331 = vld [vmem:[%s0 + $0x28] sm:$0xff]
      %v332 = vld [vmem:[%s0 + $0x30] sm:$0xff]
      %v333 = vld [vmem:[%s0 + $0x38] sm:$0xff]
      %v334 = vld [vmem:[%s0 + $0x40] sm:$0xff]
      %v335 = vld [vmem:[%s0 + $0x48] sm:$0xff]
      %v336 = vld [vmem:[%s0 + $0x50] sm:$0xff]
      %v337 = vld [vmem:[%s0 + $0x58] sm:$0xff]
      %v338 = vld [vmem:[%s0 + $0x60] sm:$0xff]
      %v339 = vld [vmem:[%s0 + $0x68] sm:$0xff]
      %v340 = vld [vmem:[%s0 + $0x70] sm:$0xff]
      %v341 = vld [vmem:[%s0 + $0x78] sm:$0xff]
      %v342 = vld [vmem:[%s315] sm:$0xff]
      %vm343 = vcmask 523264
      %v345 = vsel %vm343, %v342, 0
      %347 = vmatpush.msra.mxu0 0.0
      %348 = vmatpush.msra.mxu0 0.0
      %349 = vmatpush.msra.mxu0 0.0
      %350 = vmatpush.msra.mxu0 0.0
      %351 = vmatpush.msra.mxu0 0.0
      %352 = vmatpush.msra.mxu0 0.0
      %353 = vmatpush.msra.mxu0 0.0
      %354 = vmatpush.msra.mxu0 0.0
      %355 = vmatpush.msra.mxu0 %v340
      %356 = vmatpush.msra.mxu0 %v338
      %357 = vmatpush.msra.mxu0 %v336
      %358 = vmatpush.msra.mxu0 %v334
      %359 = vmatpush.msra.mxu0 %v332
      %360 = vmatpush.msra.mxu0 %v330
      %361 = vmatpush.msra.mxu0 %v328
      %362 = vmatpush.msra.mxu0 %v326
      %363 = vmatmul.f32.gmra.mxu0 %v345
      %v364 = vpop.f32.mrf.mxu0
      %v365 = vadd.f32 0.0, %v364
      %366 = vdwg.mxu0
      %367 = vmatpush.msra.mxu0 0.0
      %368 = vmatpush.msra.mxu0 0.0
      %369 = vmatpush.msra.mxu0 0.0
      %370 = vmatpush.msra.mxu0 0.0
      %371 = vmatpush.msra.mxu0 0.0
      %372 = vmatpush.msra.mxu0 0.0
      %373 = vmatpush.msra.mxu0 0.0
      %374 = vmatpush.msra.mxu0 0.0
      %375 = vmatpush.msra.mxu0 %v341
      %376 = vmatpush.msra.mxu0 %v339
      %377 = vmatpush.msra.mxu0 %v337
      %378 = vmatpush.msra.mxu0 %v335
      %379 = vmatpush.msra.mxu0 %v333
      %380 = vmatpush.msra.mxu0 %v331
      %381 = vmatpush.msra.mxu0 %v329
      %382 = vmatpush.msra.mxu0 %v327
      %383 = vmatmul.f32.gmra.mxu0 %v345
      %v384 = vpop.f32.mrf.mxu0
      %v385 = vadd.f32 0.0, %v384
      %386 = vdwg.mxu0
      %s387 = scalar_lea.vmem %s315, 8
      %v388 = vld [vmem:[%s387] sm:$0xff]
      %v390 = vsel %vm343, %v388, 0
      %392 = vmatpush.msra.mxu0 0.0
      %393 = vmatpush.msra.mxu0 0.0
      %394 = vmatpush.msra.mxu0 0.0
      %395 = vmatpush.msra.mxu0 0.0
      %396 = vmatpush.msra.mxu0 0.0
      %397 = vmatpush.msra.mxu0 0.0
      %398 = vmatpush.msra.mxu0 0.0
      %399 = vmatpush.msra.mxu0 0.0
      %400 = vmatpush.msra.mxu0 %v340
      %401 = vmatpush.msra.mxu0 %v338
      %402 = vmatpush.msra.mxu0 %v336
      %403 = vmatpush.msra.mxu0 %v334
      %404 = vmatpush.msra.mxu0 %v332
      %405 = vmatpush.msra.mxu0 %v330
      %406 = vmatpush.msra.mxu0 %v328
      %407 = vmatpush.msra.mxu0 %v326
      %408 = vmatmul.f32.gmra.mxu0 %v390
      %v409 = vpop.f32.mrf.mxu0
      %v410 = vadd.f32 0.0, %v409
      %411 = vdwg.mxu0
      %412 = vmatpush.msra.mxu0 0.0
      %413 = vmatpush.msra.mxu0 0.0
      %414 = vmatpush.msra.mxu0 0.0
      %415 = vmatpush.msra.mxu0 0.0
      %416 = vmatpush.msra.mxu0 0.0
      %417 = vmatpush.msra.mxu0 0.0
      %418 = vmatpush.msra.mxu0 0.0
      %419 = vmatpush.msra.mxu0 0.0
      %420 = vmatpush.msra.mxu0 %v341
      %421 = vmatpush.msra.mxu0 %v339
      %422 = vmatpush.msra.mxu0 %v337
      %423 = vmatpush.msra.mxu0 %v335
      %424 = vmatpush.msra.mxu0 %v333
      %425 = vmatpush.msra.mxu0 %v331
      %426 = vmatpush.msra.mxu0 %v329
      %427 = vmatpush.msra.mxu0 %v327
      %428 = vmatmul.f32.gmra.mxu0 %v390
      %v429 = vpop.f32.mrf.mxu0
      %v430 = vadd.f32 0.0, %v429
      %431 = vdwg.mxu0
      %v432 = vld [vmem:[%s320] sm:$0xff]
      %s433 = scalar_lea.vmem %s320, 8
      %v434 = vld [vmem:[%s433] sm:$0xff]
      %436 = vst [vmem:[#allocation1] ss:$2 sm:$0xff] %v432
      %v437 = vld.sshfl [vmem:[#allocation1] sm:$0xff pattern:$0x75316420]
      %v438 = vld.sshfl [vmem:[#allocation1 + $0x8] sm:$0xff pattern:$0x75316420]
      %440 = vst [vmem:[#allocation1] ss:$2 sm:$0xff] %v434
      %v441 = vld.sshfl [vmem:[#allocation1] sm:$0xff pattern:$0x75316420]
      %v442 = vld.sshfl [vmem:[#allocation1 + $0x8] sm:$0xff pattern:$0x75316420]
      %v443 = vld [vmem:[%s4] sm:$0xff]
      %v444 = vld [vmem:[%s4 + $0x8] sm:$0xff]
      %v445 = vld [vmem:[%s4 + $0x10] sm:$0xff]
      %v446 = vld [vmem:[%s4 + $0x18] sm:$0xff]
      %v447 = vld [vmem:[%s4 + $0x20] sm:$0xff]
      %v448 = vld [vmem:[%s4 + $0x28] sm:$0xff]
      %v449 = vld [vmem:[%s4 + $0x30] sm:$0xff]
      %v450 = vld [vmem:[%s4 + $0x38] sm:$0xff]
      %v451 = vld [vmem:[%s4 + $0x40] sm:$0xff]
      %vm452 = vcmask 97280
      %v454 = vsel %vm452, %v443, 0
      %v457 = vsel %vm452, %v444, 0
      %v460 = vsel %vm452, %v445, 0
      %v463 = vsel %vm452, %v446, 0
      %v466 = vsel %vm452, %v447, 0
      %v469 = vsel %vm452, %v448, 0
      %v472 = vsel %vm452, %v449, 0
      %v475 = vsel %vm452, %v450, 0
      %v478 = vsel %vm452, %v451, 0
      %vm480 = vcmask 1043456
      %v481 = vsel %vm480, %v437, 0
      %v483 = vsel %vm480, %v438, 0
      %v485 = vsel %vm480, %v441, 0
      %v487 = vsel %vm480, %v442, 0
      %489 = vmatpush.msra.mxu0 0.0
      %490 = vmatpush.msra.mxu0 0.0
      %491 = vmatpush.msra.mxu0 0.0
      %492 = vmatpush.msra.mxu0 0.0
      %493 = vmatpush.msra.mxu0 0.0
      %494 = vmatpush.msra.mxu0 0.0
      %495 = vmatpush.msra.mxu0 0.0
      %496 = vmatpush.msra.mxu0 0.0
      %497 = vmatpush.msra.mxu0 0.0
      %498 = vmatpush.msra.mxu0 0.0
      %499 = vmatpush.msra.mxu0 0.0
      %500 = vmatpush.msra.mxu0 0.0
      %501 = vmatpush.msra.mxu0 0.0
      %502 = vmatpush.msra.mxu0 0.0
      %503 = vmatpush.msra.mxu0 %v481
      %504 = vmatpush.msra.mxu0 %v365
      %505 = vmatmul.f32.gmra.mxu0 %v454
      %v506 = vpop.f32.mrf.mxu0
      %v507 = vadd.f32 0.0, %v506
      %508 = vmatmul.f32.gmra.mxu0 %v457
      %v509 = vpop.f32.mrf.mxu0
      %v510 = vadd.f32 0.0, %v509
      %511 = vmatmul.f32.gmra.mxu0 %v460
      %v512 = vpop.f32.mrf.mxu0
      %v513 = vadd.f32 0.0, %v512
      %514 = vmatmul.f32.gmra.mxu0 %v463
      %v515 = vpop.f32.mrf.mxu0
      %v516 = vadd.f32 0.0, %v515
      %517 = vmatmul.f32.gmra.mxu0 %v466
      %v518 = vpop.f32.mrf.mxu0
      %v519 = vadd.f32 0.0, %v518
      %520 = vmatmul.f32.gmra.mxu0 %v469
      %v521 = vpop.f32.mrf.mxu0
      %v522 = vadd.f32 0.0, %v521
      %523 = vmatmul.f32.gmra.mxu0 %v472
      %v524 = vpop.f32.mrf.mxu0
      %v525 = vadd.f32 0.0, %v524
      %526 = vmatmul.f32.gmra.mxu0 %v475
      %v527 = vpop.f32.mrf.mxu0
      %v528 = vadd.f32 0.0, %v527
      %529 = vmatmul.f32.gmra.mxu0 %v478
      %v530 = vpop.f32.mrf.mxu0
      %v531 = vadd.f32 0.0, %v530
      %532 = vdwg.mxu0
      %533 = vmatpush.msra.mxu0 0.0
      %534 = vmatpush.msra.mxu0 0.0
      %535 = vmatpush.msra.mxu0 0.0
      %536 = vmatpush.msra.mxu0 0.0
      %537 = vmatpush.msra.mxu0 0.0
      %538 = vmatpush.msra.mxu0 0.0
      %539 = vmatpush.msra.mxu0 0.0
      %540 = vmatpush.msra.mxu0 0.0
      %541 = vmatpush.msra.mxu0 0.0
      %542 = vmatpush.msra.mxu0 0.0
      %543 = vmatpush.msra.mxu0 0.0
      %544 = vmatpush.msra.mxu0 0.0
      %545 = vmatpush.msra.mxu0 0.0
      %546 = vmatpush.msra.mxu0 0.0
      %547 = vmatpush.msra.mxu0 %v483
      %548 = vmatpush.msra.mxu0 %v385
      %549 = vmatmul.f32.gmra.mxu0 %v454
      %v550 = vpop.f32.mrf.mxu0
      %v551 = vadd.f32 0.0, %v550
      %552 = vmatmul.f32.gmra.mxu0 %v457
      %v553 = vpop.f32.mrf.mxu0
      %v554 = vadd.f32 0.0, %v553
      %555 = vmatmul.f32.gmra.mxu0 %v460
      %v556 = vpop.f32.mrf.mxu0
      %v557 = vadd.f32 0.0, %v556
      %558 = vmatmul.f32.gmra.mxu0 %v463
      %v559 = vpop.f32.mrf.mxu0
      %v560 = vadd.f32 0.0, %v559
      %561 = vmatmul.f32.gmra.mxu0 %v466
      %v562 = vpop.f32.mrf.mxu0
      %v563 = vadd.f32 0.0, %v562
      %564 = vmatmul.f32.gmra.mxu0 %v469
      %v565 = vpop.f32.mrf.mxu0
      %v566 = vadd.f32 0.0, %v565
      %567 = vmatmul.f32.gmra.mxu0 %v472
      %v568 = vpop.f32.mrf.mxu0
      %v569 = vadd.f32 0.0, %v568
      %570 = vmatmul.f32.gmra.mxu0 %v475
      %v571 = vpop.f32.mrf.mxu0
      %v572 = vadd.f32 0.0, %v571
      %573 = vmatmul.f32.gmra.mxu0 %v478
      %v574 = vpop.f32.mrf.mxu0
      %v575 = vadd.f32 0.0, %v574
      %576 = vdwg.mxu0
      %577 = vmatpush.msra.mxu0 0.0
      %578 = vmatpush.msra.mxu0 0.0
      %579 = vmatpush.msra.mxu0 0.0
      %580 = vmatpush.msra.mxu0 0.0
      %581 = vmatpush.msra.mxu0 0.0
      %582 = vmatpush.msra.mxu0 0.0
      %583 = vmatpush.msra.mxu0 0.0
      %584 = vmatpush.msra.mxu0 0.0
      %585 = vmatpush.msra.mxu0 0.0
      %586 = vmatpush.msra.mxu0 0.0
      %587 = vmatpush.msra.mxu0 0.0
      %588 = vmatpush.msra.mxu0 0.0
      %589 = vmatpush.msra.mxu0 0.0
      %590 = vmatpush.msra.mxu0 0.0
      %591 = vmatpush.msra.mxu0 %v485
      %592 = vmatpush.msra.mxu0 %v410
      %593 = vmatmul.f32.gmra.mxu0 %v454
      %v594 = vpop.f32.mrf.mxu0
      %v595 = vadd.f32 0.0, %v594
      %596 = vmatmul.f32.gmra.mxu0 %v457
      %v597 = vpop.f32.mrf.mxu0
      %v598 = vadd.f32 0.0, %v597
      %599 = vmatmul.f32.gmra.mxu0 %v460
      %v600 = vpop.f32.mrf.mxu0
      %v601 = vadd.f32 0.0, %v600
      %602 = vmatmul.f32.gmra.mxu0 %v463
      %v603 = vpop.f32.mrf.mxu0
      %v604 = vadd.f32 0.0, %v603
      %605 = vmatmul.f32.gmra.mxu0 %v466
      %v606 = vpop.f32.mrf.mxu0
      %v607 = vadd.f32 0.0, %v606
      %608 = vmatmul.f32.gmra.mxu0 %v469
      %v609 = vpop.f32.mrf.mxu0
      %v610 = vadd.f32 0.0, %v609
      %611 = vmatmul.f32.gmra.mxu0 %v472
      %v612 = vpop.f32.mrf.mxu0
      %v613 = vadd.f32 0.0, %v612
      %614 = vmatmul.f32.gmra.mxu0 %v475
      %v615 = vpop.f32.mrf.mxu0
      %v616 = vadd.f32 0.0, %v615
      %617 = vmatmul.f32.gmra.mxu0 %v478
      %v618 = vpop.f32.mrf.mxu0
      %v619 = vadd.f32 0.0, %v618
      %620 = vdwg.mxu0
      %621 = vmatpush.msra.mxu0 0.0
      %622 = vmatpush.msra.mxu0 0.0
      %623 = vmatpush.msra.mxu0 0.0
      %624 = vmatpush.msra.mxu0 0.0
      %625 = vmatpush.msra.mxu0 0.0
      %626 = vmatpush.msra.mxu0 0.0
      %627 = vmatpush.msra.mxu0 0.0
      %628 = vmatpush.msra.mxu0 0.0
      %629 = vmatpush.msra.mxu0 0.0
      %630 = vmatpush.msra.mxu0 0.0
      %631 = vmatpush.msra.mxu0 0.0
      %632 = vmatpush.msra.mxu0 0.0
      %633 = vmatpush.msra.mxu0 0.0
      %634 = vmatpush.msra.mxu0 0.0
      %635 = vmatpush.msra.mxu0 %v487
      %636 = vmatpush.msra.mxu0 %v430
      %637 = vmatmul.f32.gmra.mxu0 %v454
      %v638 = vpop.f32.mrf.mxu0
      %v639 = vadd.f32 0.0, %v638
      %640 = vmatmul.f32.gmra.mxu0 %v457
      %v641 = vpop.f32.mrf.mxu0
      %v642 = vadd.f32 0.0, %v641
      %643 = vmatmul.f32.gmra.mxu0 %v460
      %v644 = vpop.f32.mrf.mxu0
      %v645 = vadd.f32 0.0, %v644
      %646 = vmatmul.f32.gmra.mxu0 %v463
      %v647 = vpop.f32.mrf.mxu0
      %v648 = vadd.f32 0.0, %v647
      %649 = vmatmul.f32.gmra.mxu0 %v466
      %v650 = vpop.f32.mrf.mxu0
      %v651 = vadd.f32 0.0, %v650
      %652 = vmatmul.f32.gmra.mxu0 %v469
      %v653 = vpop.f32.mrf.mxu0
      %v654 = vadd.f32 0.0, %v653
      %655 = vmatmul.f32.gmra.mxu0 %v472
      %v656 = vpop.f32.mrf.mxu0
      %v657 = vadd.f32 0.0, %v656
      %658 = vmatmul.f32.gmra.mxu0 %v475
      %v659 = vpop.f32.mrf.mxu0
      %v660 = vadd.f32 0.0, %v659
      %661 = vmatmul.f32.gmra.mxu0 %v478
      %v662 = vpop.f32.mrf.mxu0
      %v663 = vadd.f32 0.0, %v662
      %664 = vdwg.mxu0
      %v665 = vld [vmem:[%s6] sm:$0xff]
      %667 = vset.pattern.permute.xlu0 0
      %668 = vperm.xlu0 %667, %v665
      %v669 = vpop.permute.xlu0 %668
      %671 = vrot.lane.b32.xlu0 %v507, 17
      %v672 = vpop.permute.xlu0 %671
      %673 = vrot.lane.b32.xlu0 %v551, 17
      %v674 = vpop.permute.xlu0 %673
      %675 = vrot.lane.b32.xlu0 %v595, 17
      %v676 = vpop.permute.xlu0 %675
      %677 = vrot.lane.b32.xlu0 %v639, 17
      %v678 = vpop.permute.xlu0 %677
      %v679 = vlaneseq
      %v680 = vand.u32 %v679, 127
      %vm681 = vcmp.lt.s32.totalorder %v680, 17
      %v682 = vsel %vm681, %v676, %v678
      %v683 = vsel %vm681, %v674, %v676
      %v684 = vsel %vm681, %v672, %v674
      %v685 = vsel %vm681, %v678, %v672
      %v686 = vld [vmem:[%s1] sm:$0xf]
      %v688 = vperm.slane %v686, 0
      %v689 = vperm.slane %v686, 1
      %v690 = vperm.slane %v686, 2
      %v691 = vperm.slane %v686, 3
      %v696 = vmul.f32 %v685, %v688
      %v697 = vmul.f32 %v684, %v689
      %v698 = vmul.f32 %v683, %v690
      %v699 = vmul.f32 %v682, %v691
      %v700 = vadd.f32 %v669, %v696
      %v701 = vadd.f32 %v669, %v697
      %v702 = vadd.f32 %v669, %v698
      %v703 = vadd.f32 %v669, %v699
      %704 = vrot.lane.b32.xlu0 %v510, 16
      %v705 = vpop.permute.xlu0 %704
      %706 = vrot.lane.b32.xlu0 %v554, 16
      %v707 = vpop.permute.xlu0 %706
      %708 = vrot.lane.b32.xlu0 %v598, 16
      %v709 = vpop.permute.xlu0 %708
      %710 = vrot.lane.b32.xlu0 %v642, 16
      %v711 = vpop.permute.xlu0 %710
      %vm712 = vcmp.lt.s32.totalorder %v680, 16
      %v713 = vsel %vm712, %v709, %v711
      %v714 = vsel %vm712, %v707, %v709
      %v715 = vsel %vm712, %v705, %v707
      %v716 = vsel %vm712, %v711, %v705
      %s717 = scalar_lea.vmem %s1, 4
      %v718 = vld [vmem:[%s717] sm:$0xf]
      %v720 = vperm.slane %v718, 0
      %v721 = vperm.slane %v718, 1
      %v722 = vperm.slane %v718, 2
      %v723 = vperm.slane %v718, 3
      %v728 = vmul.f32 %v716, %v720
      %v729 = vmul.f32 %v715, %v721
      %v730 = vmul.f32 %v714, %v722
      %v731 = vmul.f32 %v713, %v723
      %v732 = vadd.f32 %v700, %v728
      %v733 = vadd.f32 %v701, %v729
      %v734 = vadd.f32 %v702, %v730
      %v735 = vadd.f32 %v703, %v731
      %736 = vrot.lane.b32.xlu0 %v513, 15
      %v737 = vpop.permute.xlu0 %736
      %738 = vrot.lane.b32.xlu0 %v557, 15
      %v739 = vpop.permute.xlu0 %738
      %740 = vrot.lane.b32.xlu0 %v601, 15
      %v741 = vpop.permute.xlu0 %740
      %742 = vrot.lane.b32.xlu0 %v645, 15
      %v743 = vpop.permute.xlu0 %742
      %vm744 = vcmp.lt.s32.totalorder %v680, 15
      %v745 = vsel %vm744, %v741, %v743
      %v746 = vsel %vm744, %v739, %v741
      %v747 = vsel %vm744, %v737, %v739
      %v748 = vsel %vm744, %v743, %v737
      %s749 = scalar_lea.vmem %s1, 8
      %v750 = vld [vmem:[%s749] sm:$0xf]
      %v752 = vperm.slane %v750, 0
      %v753 = vperm.slane %v750, 1
      %v754 = vperm.slane %v750, 2
      %v755 = vperm.slane %v750, 3
      %v760 = vmul.f32 %v748, %v752
      %v761 = vmul.f32 %v747, %v753
      %v762 = vmul.f32 %v746, %v754
      %v763 = vmul.f32 %v745, %v755
      %v764 = vadd.f32 %v732, %v760
      %v765 = vadd.f32 %v733, %v761
      %v766 = vadd.f32 %v734, %v762
      %v767 = vadd.f32 %v735, %v763
      %768 = vrot.lane.b32.xlu0 %v516, 1
      %v769 = vpop.permute.xlu0 %768
      %770 = vrot.lane.b32.xlu0 %v560, 1
      %v771 = vpop.permute.xlu0 %770
      %772 = vrot.lane.b32.xlu0 %v604, 1
      %v773 = vpop.permute.xlu0 %772
      %774 = vrot.lane.b32.xlu0 %v648, 1
      %v775 = vpop.permute.xlu0 %774
      %vm776 = vcmp.lt.s32.totalorder %v680, 1
      %v777 = vsel %vm776, %v773, %v775
      %v778 = vsel %vm776, %v771, %v773
      %v779 = vsel %vm776, %v769, %v771
      %v780 = vsel %vm776, %v775, %v769
      %s781 = scalar_lea.vmem %s1, 12
      %v782 = vld [vmem:[%s781] sm:$0xf]
      %v784 = vperm.slane %v782, 0
      %v785 = vperm.slane %v782, 1
      %v786 = vperm.slane %v782, 2
      %v787 = vperm.slane %v782, 3
      %v792 = vmul.f32 %v780, %v784
      %v793 = vmul.f32 %v779, %v785
      %v794 = vmul.f32 %v778, %v786
      %v795 = vmul.f32 %v777, %v787
      %v796 = vadd.f32 %v764, %v792
      %v797 = vadd.f32 %v765, %v793
      %v798 = vadd.f32 %v766, %v794
      %v799 = vadd.f32 %v767, %v795
      %v800 = vadd.f32 %v796, %v519
      %v801 = vadd.f32 %v797, %v563
      %v802 = vadd.f32 %v798, %v607
      %v803 = vadd.f32 %v799, %v651
      %804 = vrot.lane.b32.xlu0 %v522, 127
      %v805 = vpop.permute.xlu0 %804
      %806 = vrot.lane.b32.xlu0 %v566, 127
      %v807 = vpop.permute.xlu0 %806
      %808 = vrot.lane.b32.xlu0 %v610, 127
      %v809 = vpop.permute.xlu0 %808
      %810 = vrot.lane.b32.xlu0 %v654, 127
      %v811 = vpop.permute.xlu0 %810
      %vm812 = vcmp.lt.s32.totalorder %v680, 127
      %v813 = vsel %vm812, %v809, %v811
      %v814 = vsel %vm812, %v807, %v809
      %v815 = vsel %vm812, %v805, %v807
      %v816 = vsel %vm812, %v811, %v805
      %s817 = scalar_lea.vmem %s1, 20
      %v818 = vld [vmem:[%s817] sm:$0xf]
      %v820 = vperm.slane %v818, 0
      %v821 = vperm.slane %v818, 1
      %v822 = vperm.slane %v818, 2
      %v823 = vperm.slane %v818, 3
      %v828 = vmul.f32 %v815, %v820
      %v829 = vmul.f32 %v814, %v821
      %v830 = vmul.f32 %v813, %v822
      %v831 = vmul.f32 %v816, %v823
      %v832 = vadd.f32 %v800, %v828
      %v833 = vadd.f32 %v801, %v829
      %v834 = vadd.f32 %v802, %v830
      %v835 = vadd.f32 %v803, %v831
      %836 = vrot.lane.b32.xlu0 %v525, 113
      %v837 = vpop.permute.xlu0 %836
      %838 = vrot.lane.b32.xlu0 %v569, 113
      %v839 = vpop.permute.xlu0 %838
      %840 = vrot.lane.b32.xlu0 %v613, 113
      %v841 = vpop.permute.xlu0 %840
      %842 = vrot.lane.b32.xlu0 %v657, 113
      %v843 = vpop.permute.xlu0 %842
      %vm844 = vcmp.lt.s32.totalorder %v680, 113
      %v845 = vsel %vm844, %v841, %v843
      %v846 = vsel %vm844, %v839, %v841
      %v847 = vsel %vm844, %v837, %v839
      %v848 = vsel %vm844, %v843, %v837
      %s849 = scalar_lea.vmem %s1, 24
      %v850 = vld [vmem:[%s849] sm:$0xf]
      %v852 = vperm.slane %v850, 0
      %v853 = vperm.slane %v850, 1
      %v854 = vperm.slane %v850, 2
      %v855 = vperm.slane %v850, 3
      %v860 = vmul.f32 %v847, %v852
      %v861 = vmul.f32 %v846, %v853
      %v862 = vmul.f32 %v845, %v854
      %v863 = vmul.f32 %v848, %v855
      %v864 = vadd.f32 %v832, %v860
      %v865 = vadd.f32 %v833, %v861
      %v866 = vadd.f32 %v834, %v862
      %v867 = vadd.f32 %v835, %v863
      %868 = vrot.lane.b32.xlu0 %v528, 112
      %v869 = vpop.permute.xlu0 %868
      %870 = vrot.lane.b32.xlu0 %v572, 112
      %v871 = vpop.permute.xlu0 %870
      %872 = vrot.lane.b32.xlu0 %v616, 112
      %v873 = vpop.permute.xlu0 %872
      %874 = vrot.lane.b32.xlu0 %v660, 112
      %v875 = vpop.permute.xlu0 %874
      %vm876 = vcmp.lt.s32.totalorder %v680, 112
      %v877 = vsel %vm876, %v873, %v875
      %v878 = vsel %vm876, %v871, %v873
      %v879 = vsel %vm876, %v869, %v871
      %v880 = vsel %vm876, %v875, %v869
      %s881 = scalar_lea.vmem %s1, 28
      %v882 = vld [vmem:[%s881] sm:$0xf]
      %v884 = vperm.slane %v882, 0
      %v885 = vperm.slane %v882, 1
      %v886 = vperm.slane %v882, 2
      %v887 = vperm.slane %v882, 3
      %v892 = vmul.f32 %v879, %v884
      %v893 = vmul.f32 %v878, %v885
      %v894 = vmul.f32 %v877, %v886
      %v895 = vmul.f32 %v880, %v887
      %v896 = vadd.f32 %v864, %v892
      %v897 = vadd.f32 %v865, %v893
      %v898 = vadd.f32 %v866, %v894
      %v899 = vadd.f32 %v867, %v895
      %900 = vrot.lane.b32.xlu0 %v531, 111
      %v901 = vpop.permute.xlu0 %900
      %902 = vrot.lane.b32.xlu0 %v575, 111
      %v903 = vpop.permute.xlu0 %902
      %904 = vrot.lane.b32.xlu0 %v619, 111
      %v905 = vpop.permute.xlu0 %904
      %906 = vrot.lane.b32.xlu0 %v663, 111
      %v907 = vpop.permute.xlu0 %906
      %vm908 = vcmp.lt.s32.totalorder %v680, 111
      %v909 = vsel %vm908, %v905, %v907
      %v910 = vsel %vm908, %v903, %v905
      %v911 = vsel %vm908, %v901, %v903
      %v912 = vsel %vm908, %v907, %v901
      %s913 = scalar_lea.vmem %s1, 32
      %v914 = vld [vmem:[%s913] sm:$0xf]
      %v916 = vperm.slane %v914, 0
      %v917 = vperm.slane %v914, 1
      %v918 = vperm.slane %v914, 2
      %v919 = vperm.slane %v914, 3
      %v924 = vmul.f32 %v911, %v916
      %v925 = vmul.f32 %v910, %v917
      %v926 = vmul.f32 %v909, %v918
      %v927 = vmul.f32 %v912, %v919
      %v928 = vadd.f32 %v896, %v924
      %v929 = vadd.f32 %v897, %v925
      %v930 = vadd.f32 %v898, %v926
      %v931 = vadd.f32 %v899, %v927
      %v932 = vmax.f32 %v928, 0.0
      %v933 = vmax.f32 %v929, 0.0
      %v934 = vmax.f32 %v930, 0.0
      %v935 = vmax.f32 %v931, 0.0
      %v936 = vld [vmem:[%s5] sm:$0xff]
      %v937 = vld [vmem:[%s5 + $0x8] sm:$0xff]
      %v938 = vld [vmem:[%s5 + $0x10] sm:$0xff]
      %v939 = vld [vmem:[%s5 + $0x18] sm:$0xff]
      %v940 = vld [vmem:[%s5 + $0x20] sm:$0xff]
      %v941 = vld [vmem:[%s5 + $0x28] sm:$0xff]
      %v942 = vld [vmem:[%s5 + $0x30] sm:$0xff]
      %v943 = vld [vmem:[%s5 + $0x38] sm:$0xff]
      %v944 = vld [vmem:[%s5 + $0x40] sm:$0xff]
      %vm945 = vcmask 64512
      %v947 = vsel %vm945, %v936, 0
      %v950 = vsel %vm945, %v937, 0
      %v953 = vsel %vm945, %v938, 0
      %v956 = vsel %vm945, %v939, 0
      %v959 = vsel %vm945, %v940, 0
      %v962 = vsel %vm945, %v941, 0
      %v965 = vsel %vm945, %v942, 0
      %v968 = vsel %vm945, %v943, 0
      %v971 = vsel %vm945, %v944, 0
      %973 = vmatpush.msra.mxu0 0.0
      %974 = vmatpush.msra.mxu0 0.0
      %975 = vmatpush.msra.mxu0 0.0
      %976 = vmatpush.msra.mxu0 0.0
      %977 = vmatpush.msra.mxu0 0.0
      %978 = vmatpush.msra.mxu0 0.0
      %979 = vmatpush.msra.mxu0 0.0
      %980 = vmatpush.msra.mxu0 0.0
      %981 = vmatpush.msra.mxu0 0.0
      %982 = vmatpush.msra.mxu0 0.0
      %983 = vmatpush.msra.mxu0 0.0
      %984 = vmatpush.msra.mxu0 0.0
      %985 = vmatpush.msra.mxu0 0.0
      %986 = vmatpush.msra.mxu0 0.0
      %987 = vmatpush.msra.mxu0 0.0
      %988 = vmatpush.msra.mxu0 %v932
      %989 = vmatmul.f32.gmra.mxu0 %v947
      %v990 = vpop.f32.mrf.mxu0
      %v991 = vadd.f32 0.0, %v990
      %992 = vmatmul.f32.gmra.mxu0 %v950
      %v993 = vpop.f32.mrf.mxu0
      %v994 = vadd.f32 0.0, %v993
      %995 = vmatmul.f32.gmra.mxu0 %v953
      %v996 = vpop.f32.mrf.mxu0
      %v997 = vadd.f32 0.0, %v996
      %998 = vmatmul.f32.gmra.mxu0 %v956
      %v999 = vpop.f32.mrf.mxu0
      %v1000 = vadd.f32 0.0, %v999
      %1001 = vmatmul.f32.gmra.mxu0 %v959
      %v1002 = vpop.f32.mrf.mxu0
      %v1003 = vadd.f32 0.0, %v1002
      %1004 = vmatmul.f32.gmra.mxu0 %v962
      %v1005 = vpop.f32.mrf.mxu0
      %v1006 = vadd.f32 0.0, %v1005
      %1007 = vmatmul.f32.gmra.mxu0 %v965
      %v1008 = vpop.f32.mrf.mxu0
      %v1009 = vadd.f32 0.0, %v1008
      %1010 = vmatmul.f32.gmra.mxu0 %v968
      %v1011 = vpop.f32.mrf.mxu0
      %v1012 = vadd.f32 0.0, %v1011
      %1013 = vmatmul.f32.gmra.mxu0 %v971
      %v1014 = vpop.f32.mrf.mxu0
      %v1015 = vadd.f32 0.0, %v1014
      %1016 = vdwg.mxu0
      %1017 = vmatpush.msra.mxu0 0.0
      %1018 = vmatpush.msra.mxu0 0.0
      %1019 = vmatpush.msra.mxu0 0.0
      %1020 = vmatpush.msra.mxu0 0.0
      %1021 = vmatpush.msra.mxu0 0.0
      %1022 = vmatpush.msra.mxu0 0.0
      %1023 = vmatpush.msra.mxu0 0.0
      %1024 = vmatpush.msra.mxu0 0.0
      %1025 = vmatpush.msra.mxu0 0.0
      %1026 = vmatpush.msra.mxu0 0.0
      %1027 = vmatpush.msra.mxu0 0.0
      %1028 = vmatpush.msra.mxu0 0.0
      %1029 = vmatpush.msra.mxu0 0.0
      %1030 = vmatpush.msra.mxu0 0.0
      %1031 = vmatpush.msra.mxu0 0.0
      %1032 = vmatpush.msra.mxu0 %v933
      %1033 = vmatmul.f32.gmra.mxu0 %v947
      %v1034 = vpop.f32.mrf.mxu0
      %v1035 = vadd.f32 0.0, %v1034
      %1036 = vmatmul.f32.gmra.mxu0 %v950
      %v1037 = vpop.f32.mrf.mxu0
      %v1038 = vadd.f32 0.0, %v1037
      %1039 = vmatmul.f32.gmra.mxu0 %v953
      %v1040 = vpop.f32.mrf.mxu0
      %v1041 = vadd.f32 0.0, %v1040
      %1042 = vmatmul.f32.gmra.mxu0 %v956
      %v1043 = vpop.f32.mrf.mxu0
      %v1044 = vadd.f32 0.0, %v1043
      %1045 = vmatmul.f32.gmra.mxu0 %v959
      %v1046 = vpop.f32.mrf.mxu0
      %v1047 = vadd.f32 0.0, %v1046
      %1048 = vmatmul.f32.gmra.mxu0 %v962
      %v1049 = vpop.f32.mrf.mxu0
      %v1050 = vadd.f32 0.0, %v1049
      %1051 = vmatmul.f32.gmra.mxu0 %v965
      %v1052 = vpop.f32.mrf.mxu0
      %v1053 = vadd.f32 0.0, %v1052
      %1054 = vmatmul.f32.gmra.mxu0 %v968
      %v1055 = vpop.f32.mrf.mxu0
      %v1056 = vadd.f32 0.0, %v1055
      %1057 = vmatmul.f32.gmra.mxu0 %v971
      %v1058 = vpop.f32.mrf.mxu0
      %v1059 = vadd.f32 0.0, %v1058
      %1060 = vdwg.mxu0
      %1061 = vmatpush.msra.mxu0 0.0
      %1062 = vmatpush.msra.mxu0 0.0
      %1063 = vmatpush.msra.mxu0 0.0
      %1064 = vmatpush.msra.mxu0 0.0
      %1065 = vmatpush.msra.mxu0 0.0
      %1066 = vmatpush.msra.mxu0 0.0
      %1067 = vmatpush.msra.mxu0 0.0
      %1068 = vmatpush.msra.mxu0 0.0
      %1069 = vmatpush.msra.mxu0 0.0
      %1070 = vmatpush.msra.mxu0 0.0
      %1071 = vmatpush.msra.mxu0 0.0
      %1072 = vmatpush.msra.mxu0 0.0
      %1073 = vmatpush.msra.mxu0 0.0
      %1074 = vmatpush.msra.mxu0 0.0
      %1075 = vmatpush.msra.mxu0 0.0
      %1076 = vmatpush.msra.mxu0 %v934
      %1077 = vmatmul.f32.gmra.mxu0 %v947
      %v1078 = vpop.f32.mrf.mxu0
      %v1079 = vadd.f32 0.0, %v1078
      %1080 = vmatmul.f32.gmra.mxu0 %v950
      %v1081 = vpop.f32.mrf.mxu0
      %v1082 = vadd.f32 0.0, %v1081
      %1083 = vmatmul.f32.gmra.mxu0 %v953
      %v1084 = vpop.f32.mrf.mxu0
      %v1085 = vadd.f32 0.0, %v1084
      %1086 = vmatmul.f32.gmra.mxu0 %v956
      %v1087 = vpop.f32.mrf.mxu0
      %v1088 = vadd.f32 0.0, %v1087
      %1089 = vmatmul.f32.gmra.mxu0 %v959
      %v1090 = vpop.f32.mrf.mxu0
      %v1091 = vadd.f32 0.0, %v1090
      %1092 = vmatmul.f32.gmra.mxu0 %v962
      %v1093 = vpop.f32.mrf.mxu0
      %v1094 = vadd.f32 0.0, %v1093
      %1095 = vmatmul.f32.gmra.mxu0 %v965
      %v1096 = vpop.f32.mrf.mxu0
      %v1097 = vadd.f32 0.0, %v1096
      %1098 = vmatmul.f32.gmra.mxu0 %v968
      %v1099 = vpop.f32.mrf.mxu0
      %v1100 = vadd.f32 0.0, %v1099
      %1101 = vmatmul.f32.gmra.mxu0 %v971
      %v1102 = vpop.f32.mrf.mxu0
      %v1103 = vadd.f32 0.0, %v1102
      %1104 = vdwg.mxu0
      %1105 = vmatpush.msra.mxu0 0.0
      %1106 = vmatpush.msra.mxu0 0.0
      %1107 = vmatpush.msra.mxu0 0.0
      %1108 = vmatpush.msra.mxu0 0.0
      %1109 = vmatpush.msra.mxu0 0.0
      %1110 = vmatpush.msra.mxu0 0.0
      %1111 = vmatpush.msra.mxu0 0.0
      %1112 = vmatpush.msra.mxu0 0.0
      %1113 = vmatpush.msra.mxu0 0.0
      %1114 = vmatpush.msra.mxu0 0.0
      %1115 = vmatpush.msra.mxu0 0.0
      %1116 = vmatpush.msra.mxu0 0.0
      %1117 = vmatpush.msra.mxu0 0.0
      %1118 = vmatpush.msra.mxu0 0.0
      %1119 = vmatpush.msra.mxu0 0.0
      %1120 = vmatpush.msra.mxu0 %v935
      %1121 = vmatmul.f32.gmra.mxu0 %v947
      %v1122 = vpop.f32.mrf.mxu0
      %v1123 = vadd.f32 0.0, %v1122
      %1124 = vmatmul.f32.gmra.mxu0 %v950
      %v1125 = vpop.f32.mrf.mxu0
      %v1126 = vadd.f32 0.0, %v1125
      %1127 = vmatmul.f32.gmra.mxu0 %v953
      %v1128 = vpop.f32.mrf.mxu0
      %v1129 = vadd.f32 0.0, %v1128
      %1130 = vmatmul.f32.gmra.mxu0 %v956
      %v1131 = vpop.f32.mrf.mxu0
      %v1132 = vadd.f32 0.0, %v1131
      %1133 = vmatmul.f32.gmra.mxu0 %v959
      %v1134 = vpop.f32.mrf.mxu0
      %v1135 = vadd.f32 0.0, %v1134
      %1136 = vmatmul.f32.gmra.mxu0 %v962
      %v1137 = vpop.f32.mrf.mxu0
      %v1138 = vadd.f32 0.0, %v1137
      %1139 = vmatmul.f32.gmra.mxu0 %v965
      %v1140 = vpop.f32.mrf.mxu0
      %v1141 = vadd.f32 0.0, %v1140
      %1142 = vmatmul.f32.gmra.mxu0 %v968
      %v1143 = vpop.f32.mrf.mxu0
      %v1144 = vadd.f32 0.0, %v1143
      %1145 = vmatmul.f32.gmra.mxu0 %v971
      %v1146 = vpop.f32.mrf.mxu0
      %v1147 = vadd.f32 0.0, %v1146
      %1148 = vdwg.mxu0
      %v1149 = vld [vmem:[%s7] sm:$0xff]
      %1151 = vset.pattern.permute.xlu0 0
      %1152 = vperm.xlu0 %1151, %v1149
      %v1153 = vpop.permute.xlu0 %1152
      %1155 = vrot.lane.b32.xlu0 %v991, 17
      %v1156 = vpop.permute.xlu0 %1155
      %1157 = vrot.lane.b32.xlu0 %v1035, 17
      %v1158 = vpop.permute.xlu0 %1157
      %1159 = vrot.lane.b32.xlu0 %v1079, 17
      %v1160 = vpop.permute.xlu0 %1159
      %1161 = vrot.lane.b32.xlu0 %v1123, 17
      %v1162 = vpop.permute.xlu0 %1161
      %v1163 = vsel %vm681, %v1160, %v1162
      %v1164 = vsel %vm681, %v1158, %v1160
      %v1165 = vsel %vm681, %v1156, %v1158
      %v1166 = vsel %vm681, %v1162, %v1156
      %v1167 = vmul.f32 %v1166, %v688
      %v1168 = vmul.f32 %v1165, %v689
      %v1169 = vmul.f32 %v1164, %v690
      %v1170 = vmul.f32 %v1163, %v691
      %v1171 = vadd.f32 %v1153, %v1167
      %v1172 = vadd.f32 %v1153, %v1168
      %v1173 = vadd.f32 %v1153, %v1169
      %v1174 = vadd.f32 %v1153, %v1170
      %1175 = vrot.lane.b32.xlu0 %v994, 16
      %v1176 = vpop.permute.xlu0 %1175
      %1177 = vrot.lane.b32.xlu0 %v1038, 16
      %v1178 = vpop.permute.xlu0 %1177
      %1179 = vrot.lane.b32.xlu0 %v1082, 16
      %v1180 = vpop.permute.xlu0 %1179
      %1181 = vrot.lane.b32.xlu0 %v1126, 16
      %v1182 = vpop.permute.xlu0 %1181
      %v1183 = vsel %vm712, %v1180, %v1182
      %v1184 = vsel %vm712, %v1178, %v1180
      %v1185 = vsel %vm712, %v1176, %v1178
      %v1186 = vsel %vm712, %v1182, %v1176
      %v1187 = vmul.f32 %v1186, %v720
      %v1188 = vmul.f32 %v1185, %v721
      %v1189 = vmul.f32 %v1184, %v722
      %v1190 = vmul.f32 %v1183, %v723
      %v1191 = vadd.f32 %v1171, %v1187
      %v1192 = vadd.f32 %v1172, %v1188
      %v1193 = vadd.f32 %v1173, %v1189
      %v1194 = vadd.f32 %v1174, %v1190
      %1195 = vrot.lane.b32.xlu0 %v997, 15
      %v1196 = vpop.permute.xlu0 %1195
      %1197 = vrot.lane.b32.xlu0 %v1041, 15
      %v1198 = vpop.permute.xlu0 %1197
      %1199 = vrot.lane.b32.xlu0 %v1085, 15
      %v1200 = vpop.permute.xlu0 %1199
      %1201 = vrot.lane.b32.xlu0 %v1129, 15
      %v1202 = vpop.permute.xlu0 %1201
      %v1203 = vsel %vm744, %v1200, %v1202
      %v1204 = vsel %vm744, %v1198, %v1200
      %v1205 = vsel %vm744, %v1196, %v1198
      %v1206 = vsel %vm744, %v1202, %v1196
      %v1207 = vmul.f32 %v1206, %v752
      %v1208 = vmul.f32 %v1205, %v753
      %v1209 = vmul.f32 %v1204, %v754
      %v1210 = vmul.f32 %v1203, %v755
      %v1211 = vadd.f32 %v1191, %v1207
      %v1212 = vadd.f32 %v1192, %v1208
      %v1213 = vadd.f32 %v1193, %v1209
      %v1214 = vadd.f32 %v1194, %v1210
      %1215 = vrot.lane.b32.xlu0 %v1000, 1
      %v1216 = vpop.permute.xlu0 %1215
      %1217 = vrot.lane.b32.xlu0 %v1044, 1
      %v1218 = vpop.permute.xlu0 %1217
      %1219 = vrot.lane.b32.xlu0 %v1088, 1
      %v1220 = vpop.permute.xlu0 %1219
      %1221 = vrot.lane.b32.xlu0 %v1132, 1
      %v1222 = vpop.permute.xlu0 %1221
      %v1223 = vsel %vm776, %v1220, %v1222
      %v1224 = vsel %vm776, %v1218, %v1220
      %v1225 = vsel %vm776, %v1216, %v1218
      %v1226 = vsel %vm776, %v1222, %v1216
      %v1227 = vmul.f32 %v1226, %v784
      %v1228 = vmul.f32 %v1225, %v785
      %v1229 = vmul.f32 %v1224, %v786
      %v1230 = vmul.f32 %v1223, %v787
      %v1231 = vadd.f32 %v1211, %v1227
      %v1232 = vadd.f32 %v1212, %v1228
      %v1233 = vadd.f32 %v1213, %v1229
      %v1234 = vadd.f32 %v1214, %v1230
      %v1235 = vadd.f32 %v1231, %v1003
      %v1236 = vadd.f32 %v1232, %v1047
      %v1237 = vadd.f32 %v1233, %v1091
      %v1238 = vadd.f32 %v1234, %v1135
      %1239 = vrot.lane.b32.xlu0 %v1006, 127
      %v1240 = vpop.permute.xlu0 %1239
      %1241 = vrot.lane.b32.xlu0 %v1050, 127
      %v1242 = vpop.permute.xlu0 %1241
      %1243 = vrot.lane.b32.xlu0 %v1094, 127
      %v1244 = vpop.permute.xlu0 %1243
      %1245 = vrot.lane.b32.xlu0 %v1138, 127
      %v1246 = vpop.permute.xlu0 %1245
      %v1247 = vsel %vm812, %v1244, %v1246
      %v1248 = vsel %vm812, %v1242, %v1244
      %v1249 = vsel %vm812, %v1240, %v1242
      %v1250 = vsel %vm812, %v1246, %v1240
      %v1251 = vmul.f32 %v1249, %v820
      %v1252 = vmul.f32 %v1248, %v821
      %v1253 = vmul.f32 %v1247, %v822
      %v1254 = vmul.f32 %v1250, %v823
      %v1255 = vadd.f32 %v1235, %v1251
      %v1256 = vadd.f32 %v1236, %v1252
      %v1257 = vadd.f32 %v1237, %v1253
      %v1258 = vadd.f32 %v1238, %v1254
      %1259 = vrot.lane.b32.xlu0 %v1009, 113
      %v1260 = vpop.permute.xlu0 %1259
      %1261 = vrot.lane.b32.xlu0 %v1053, 113
      %v1262 = vpop.permute.xlu0 %1261
      %1263 = vrot.lane.b32.xlu0 %v1097, 113
      %v1264 = vpop.permute.xlu0 %1263
      %1265 = vrot.lane.b32.xlu0 %v1141, 113
      %v1266 = vpop.permute.xlu0 %1265
      %v1267 = vsel %vm844, %v1264, %v1266
      %v1268 = vsel %vm844, %v1262, %v1264
      %v1269 = vsel %vm844, %v1260, %v1262
      %v1270 = vsel %vm844, %v1266, %v1260
      %v1271 = vmul.f32 %v1269, %v852
      %v1272 = vmul.f32 %v1268, %v853
      %v1273 = vmul.f32 %v1267, %v854
      %v1274 = vmul.f32 %v1270, %v855
      %v1275 = vadd.f32 %v1255, %v1271
      %v1276 = vadd.f32 %v1256, %v1272
      %v1277 = vadd.f32 %v1257, %v1273
      %v1278 = vadd.f32 %v1258, %v1274
      %1279 = vrot.lane.b32.xlu0 %v1012, 112
      %v1280 = vpop.permute.xlu0 %1279
      %1281 = vrot.lane.b32.xlu0 %v1056, 112
      %v1282 = vpop.permute.xlu0 %1281
      %1283 = vrot.lane.b32.xlu0 %v1100, 112
      %v1284 = vpop.permute.xlu0 %1283
      %1285 = vrot.lane.b32.xlu0 %v1144, 112
      %v1286 = vpop.permute.xlu0 %1285
      %v1287 = vsel %vm876, %v1284, %v1286
      %v1288 = vsel %vm876, %v1282, %v1284
      %v1289 = vsel %vm876, %v1280, %v1282
      %v1290 = vsel %vm876, %v1286, %v1280
      %v1291 = vmul.f32 %v1289, %v884
      %v1292 = vmul.f32 %v1288, %v885
      %v1293 = vmul.f32 %v1287, %v886
      %v1294 = vmul.f32 %v1290, %v887
      %v1295 = vadd.f32 %v1275, %v1291
      %v1296 = vadd.f32 %v1276, %v1292
      %v1297 = vadd.f32 %v1277, %v1293
      %v1298 = vadd.f32 %v1278, %v1294
      %1299 = vrot.lane.b32.xlu0 %v1015, 111
      %v1300 = vpop.permute.xlu0 %1299
      %1301 = vrot.lane.b32.xlu0 %v1059, 111
      %v1302 = vpop.permute.xlu0 %1301
      %1303 = vrot.lane.b32.xlu0 %v1103, 111
      %v1304 = vpop.permute.xlu0 %1303
      %1305 = vrot.lane.b32.xlu0 %v1147, 111
      %v1306 = vpop.permute.xlu0 %1305
      %v1307 = vsel %vm908, %v1304, %v1306
      %v1308 = vsel %vm908, %v1302, %v1304
      %v1309 = vsel %vm908, %v1300, %v1302
      %v1310 = vsel %vm908, %v1306, %v1300
      %v1311 = vmul.f32 %v1309, %v916
      %v1312 = vmul.f32 %v1308, %v917
      %v1313 = vmul.f32 %v1307, %v918
      %v1314 = vmul.f32 %v1310, %v919
      %v1315 = vadd.f32 %v1295, %v1311
      %v1316 = vadd.f32 %v1296, %v1312
      %v1317 = vadd.f32 %v1297, %v1313
      %v1318 = vadd.f32 %v1298, %v1314
      %v1319 = vmax.f32 %v1315, 0.0
      %v1320 = vmax.f32 %v1316, 0.0
      %v1321 = vmax.f32 %v1317, 0.0
      %v1322 = vmax.f32 %v1318, 0.0
      %v1325 = vrot.slane %v1320, 4
      %v1326 = vsel %vm480, %v1319, %v1325
      %1328 = vst [vmem:[%s325] sm:$0xff] %v1326
      %v1331 = vrot.slane %v1322, 4
      %v1332 = vsel %vm480, %v1321, %v1331
      %s1334 = scalar_lea.vmem %s325, 8
      %1335 = vst [vmem:[%s1334] sm:$0xff] %v1332
      %p1336 = scmp.lt.s32.totalorder %s19, 1
      %s1337 = scalar_select %p1336, %s19, 1
      %s1338 = smul.addr %s1337, 4
      %s1339 = smul.addr %s1338, 4
      %s1340 = scalar_lea.vmem %s8, %s1339
      // Predicated region
      $region53: #{decoder_block_forward.1} parent=51 // pred_check
        %p1341 = pneg %p215
      $region54: #{decoder_block_forward.1} parent=51 // pred_check_branch
        %1343 = sbr.rel (%p1341) target = $region56
      $region55: #{decoder_block_forward.1} parent=51 // pred_region
        _
      $region56: #{decoder_block_forward.1} parent=51 // pred_fallthru
        _
    $region52: #{decoder_block_forward.1} parent=5 // pred_fallthru
      _
    %p1344 = scmp.le.s32.totalorder 2, %s14
    // Predicated region
    $region57: #{decoder_block_forward.1} parent=5 // pred_check
      %p1345 = pneg %p1344
    $region58: #{decoder_block_forward.1} parent=5 // pred_check_branch
      %1347 = sbr.rel (%p1345) target = $region60
    $region59: #{decoder_block_forward.1} parent=5 // pred_region
      %s1348 = ssub.s32 %s14, 2
      // Predicated region
      $region61: #{decoder_block_forward.1} parent=59 // pred_check
        %p1349 = pneg %p221
      $region62: #{decoder_block_forward.1} parent=59 // pred_check_branch
        %1351 = sbr.rel (%p1349) target = $region64
      $region63: #{decoder_block_forward.1} parent=59 // pred_region
        %p1352 = scmp.lt.s32.totalorder %s20, 1
        %s1353 = scalar_select %p1352, %s20, 1
        %s1354 = smul.addr %s1353, 4
        %s1355 = smul.addr %s1354, 4
        %s1356 = scalar_lea.vmem %s8, %s1355
      $region64: #{decoder_block_forward.1} parent=59 // pred_fallthru
        _
    $region60: #{decoder_block_forward.1} parent=5 // pred_fallthru
      _
  $region6: #{decoder_block_forward.1} parent=0 // loop_footer
    %s18 = sadd.s32 1, %s14
  $region7: #{decoder_block_forward.1} parent=0 // loop_footer_branch
    %13 = sbr.rel target = $region3
  $region8: #{decoder_block_forward.1} parent=0 // loop_exit
    _

</llo_original>
